<compile_context>
chip_gen: v6e
topology: v6e:2x2x1
jax: 0.10.0
libtpu: 0.0.40
codegen_flags: <defaults>
</compile_context>

<pallas_src>
import jax
import jax.numpy as jnp
from jax.experimental import pallas as pl
from jax.experimental.pallas import tpu as pltpu

EPS_IN = 1e-3   # InstanceNorm1d eps specified in the module
EPS_BN = 1e-5   # BatchNorm1d default eps


def inliner_kernel(x_ref, blkt_ref, blk_ref, w1_ref, w2_ref, w3_ref, vp_ref, o_ref):
    """x_ref:   (Cin, B*N) input slab, batch-major along lanes.
    blkt_ref:   (B*N, B) block indicator (1.0 on rows belonging to batch b).
    blk_ref:    (B, B*N) its transpose (precomputed; no in-kernel transpose).
    w*_ref:     (Cout, Cin) 1x1-conv weights.
    vp_ref:     (64, 8) packed per-channel vectors
                (cols: 0=g1 1=be1 2=g2 3=be2 4=g3 5=be3 6=w4 7=b4).
    o_ref:      (1, B*N) output slab."""
    B = blk_ref.shape[0]
    BN = x_ref.shape[1]
    N = BN // B
    inv_n = 1.0 / float(N)
    inv_b = 1.0 / float(B)

    h = x_ref[...].astype(jnp.float32)           # (Cin, B*N); cast in-kernel
    blk_t = blkt_ref[...]                        # (B*N, B)
    blk = blk_ref[...]                           # (B, B*N)

    for li, w_ref in enumerate((w1_ref, w2_ref, w3_ref)):
        w = w_ref[...]                           # (Cout, Cin)
        cout = w.shape[0]
        g = vp_ref[0:cout, 2 * li:2 * li + 1]    # (Cout, 1)
        beta = vp_ref[0:cout, 2 * li + 1:2 * li + 2]

        # One MXU matmul for ALL batches (conv bias cancels inside IN).
        y = jnp.dot(w, h, preferred_element_type=jnp.float32)       # (Cout, B*N)

        # One-pass per-(batch, channel) InstanceNorm stats as MXU block
        # reductions against the indicator (no lane slicing; any N works).
        s1 = jnp.dot(y, blk_t, preferred_element_type=jnp.float32)      # (Cout, B)
        s2 = jnp.dot(y * y, blk_t, preferred_element_type=jnp.float32)  # (Cout, B)
        mu = s1 * inv_n
        var = jnp.maximum(s2 * inv_n - mu * mu, 0.0)
        inv_std = jax.lax.rsqrt(var + EPS_IN)                        # (Cout, B)

        # Fused IN->BN (training mode): post-IN per-(b,c) mean over N is 0, so
        # the BN batch mean is 0 and the BN per-channel batch variance is
        # mean_b[var / (var + EPS_IN)], derived from the IN stats in registers.
        r = var * inv_std * inv_std                                  # (Cout, B)
        inv_std_bn = jax.lax.rsqrt(jnp.sum(r, axis=1, keepdims=True) * inv_b
                                   + EPS_BN)                         # (Cout, 1)

        # Per-(b,c) scale/shift, broadcast back to the lane-dense slab on the
        # MXU (tiny K=B matmul), then a single fused FMA + ReLU on the VPU.
        scale_cb = g * inv_std * inv_std_bn                          # (Cout, B)
        shift_cb = beta - mu * scale_cb                              # (Cout, B)
        scale = jnp.dot(scale_cb, blk, preferred_element_type=jnp.float32)
        shift = jnp.dot(shift_cb, blk, preferred_element_type=jnp.float32)
        h = jnp.maximum(y * scale + shift, 0.0)                      # (Cout, B*N)

    # Final 1x1 conv 4 -> 1 on the VPU (broadcast mul + 4-sublane reduce),
    # stored once as a single lane-dense (1, B*N) slab.
    w4 = vp_ref[0:4, 6:7]                                            # (4, 1)
    b4 = vp_ref[0:1, 7:8]                                            # (1, 1)
    o_ref[...] = (jnp.sum(h * w4, axis=0, keepdims=True) + b4).astype(o_ref.dtype)


def inliner_predictor(d, packed):
    """d: (B, C, N) NCL input (same layout as PyTorch). Returns (B, 1, N) f32."""
    w1, w2, w3, vp = packed
    B, C, N = d.shape
    BN = B * N

    # One-time relayout to a single lane-dense slab (C, B*N).  The input keeps
    # its original dtype over HBM->VMEM (bf16 stays bf16); cast is in-kernel.
    x = jnp.transpose(d, (1, 0, 2)).reshape(C, BN)

    # Block-indicator matrices: (BN, B) for per-batch stat reductions and
    # (B, BN) for broadcasting per-(b,c) scale/shift back onto the slab.
    col_batch = jnp.arange(BN, dtype=jnp.int32) // N
    blk = (jnp.arange(B, dtype=jnp.int32)[:, None]
           == col_batch[None, :]).astype(jnp.float32)                # (B, BN)
    blk_t = blk.T                                                    # (BN, B)

    # VMEM budget: peak live set is a handful of (64, B*N) f32 slabs plus the
    # input; sized with 2x headroom and clamped to fit v7x's 64 MiB VMEM.
    work_bytes = 4 * BN * (C + 4 * 64 + 2 * B + 8)
    vmem_limit = int(min(max(2 * work_bytes + (2 << 20), 16 << 20), 48 << 20))

    conv_flops = 2 * BN * (C * 64 + 64 * 16 + 16 * 4 + 4 * 1)
    stat_flops = 8 * BN * B * (64 + 16 + 4)   # s1/s2 reductions + scale/shift bcast
    elem_flops = 6 * BN * (64 + 16 + 4)
    cost = pl.CostEstimate(
        flops=int(conv_flops + stat_flops + elem_flops),
        transcendentals=int((64 + 16 + 4) * (B + 1)),
        bytes_accessed=int(d.size * d.dtype.itemsize
                           + 4 * (64 * C + 16 * 64 + 4 * 16 + 64 * 8 + 2 * B * BN)
                           + 4 * BN))

    out = pl.pallas_call(
        inliner_kernel,
        out_shape=jax.ShapeDtypeStruct((1, BN), jnp.float32),
        in_specs=[pl.BlockSpec(memory_space=pltpu.MemorySpace.VMEM)] * 7,
        out_specs=pl.BlockSpec(memory_space=pltpu.MemorySpace.VMEM),
        compiler_params=pltpu.CompilerParams(vmem_limit_bytes=vmem_limit),
        cost_estimate=cost,
    )(x, blk_t, blk, w1, w2, w3, vp)

    return out.reshape(B, 1, N)


def init_params(key, channels):
    """Synthetic parameters in PyTorch layout: W (Cout, Cin), vectors (Cout,)."""
    dims = [(channels, 64), (64, 16), (16, 4), (4, 1)]
    keys = jax.random.split(key, 14)
    params = []
    ki = 0
    for i, (cin, cout) in enumerate(dims):
        w = jax.random.normal(keys[ki], (cout, cin), jnp.float32) / jnp.sqrt(float(cin))
        ki += 1
        b = jax.random.normal(keys[ki], (cout,), jnp.float32) * 0.1
        ki += 1
        params += [w, b]
        if i < 3:
            # PyTorch init is gamma=1, beta=0; perturb so the affine path is exercised.
            g = 1.0 + 0.1 * jax.random.normal(keys[ki], (cout,), jnp.float32)
            ki += 1
            be = 0.1 * jax.random.normal(keys[ki], (cout,), jnp.float32)
            ki += 1
            params += [g, be]
    return params


def pack_params(params):
    """Pack the small per-channel vectors into one (64, 8) array (done once,
    outside the per-call path).  Conv biases b1/b2/b3 cancel exactly inside
    InstanceNorm, so they never reach the kernel."""
    (w1, b1, g1, be1, w2, b2, g2, be2, w3, b3, g3, be3, w4, b4) = params
    # The architecture fixes the Couts at (64, 16, 4, 1); guard the packing.
    assert w1.shape[0] == 64 and w2.shape[0] == 16 and w3.shape[0] == 4 and w4.shape[0] == 1
    vp = jnp.zeros((64, 8), jnp.float32)
    vp = vp.at[:64, 0].set(g1)
    vp = vp.at[:64, 1].set(be1)
    vp = vp.at[:16, 2].set(g2)
    vp = vp.at[:16, 3].set(be2)
    vp = vp.at[:4, 4].set(g3)
    vp = vp.at[:4, 5].set(be3)
    vp = vp.at[:4, 6].set(w4.reshape(-1))
    vp = vp.at[:1, 7].set(b4.reshape(-1))
    return (w1, w2, w3, vp)


def reference(d, params):
    """Pure-JAX reference with the original, unfused module semantics."""
    (w1, b1, g1, be1, w2, b2, g2, be2, w3, b3, g3, be3, w4, b4) = params
    h = d.astype(jnp.float32)                                        # (B, C, N)
    for (w, b, g, be) in [(w1, b1, g1, be1), (w2, b2, g2, be2), (w3, b3, g3, be3)]:
        y = jnp.einsum('oc,bcn->bon', w, h) + b[None, :, None]       # Conv1d(k=1)
        mu = jnp.mean(y, axis=2, keepdims=True)                      # InstanceNorm1d
        var = jnp.mean((y - mu) ** 2, axis=2, keepdims=True)
        y = (y - mu) / jnp.sqrt(var + EPS_IN)
        mu_b = jnp.mean(y, axis=(0, 2), keepdims=True)               # BatchNorm1d (train)
        var_b = jnp.mean((y - mu_b) ** 2, axis=(0, 2), keepdims=True)
        y = g[None, :, None] * (y - mu_b) / jnp.sqrt(var_b + EPS_BN) + be[None, :, None]
        h = jnp.maximum(y, 0.0)                                      # ReLU
    return jnp.einsum('oc,bcn->bon', w4, h) + b4[None, :, None]      # final Conv1d


if __name__ == "__main__":
    key = jax.random.PRNGKey(0)
    kx, kp = jax.random.split(key)

    B, C, N = 2, 8, 16                      # small shapes: batch=2, channels=8, seq len=16
    d = jax.random.normal(kx, (B, C, N), jnp.float32)
    params = init_params(kp, C)
    packed = pack_params(params)

    out = inliner_predictor(d, packed)
    out = jax.block_until_ready(out)

    assert out.shape == (B, 1, N), out.shape
    ref = reference(d, params)
    err = float(jnp.max(jnp.abs(out - ref)))
    assert jnp.allclose(out, ref, atol=1e-4, rtol=1e-4), err

    print("KERNEL_OK")
</pallas_src>

<mosaic_0001>
module attributes {stable_mosaic.version = 11 : i64} {
  func.func @inliner_kernel(%arg0: memref<8x32xf32, #tpu.memory_space<vmem>>, %arg1: memref<32x2xf32, #tpu.memory_space<vmem>>, %arg2: memref<2x32xf32, #tpu.memory_space<vmem>>, %arg3: memref<64x8xf32, #tpu.memory_space<vmem>>, %arg4: memref<16x64xf32, #tpu.memory_space<vmem>>, %arg5: memref<4x16xf32, #tpu.memory_space<vmem>>, %arg6: memref<64x8xf32, #tpu.memory_space<vmem>>, %arg7: memref<1x32xf32, #tpu.memory_space<vmem>>) attributes {dimension_semantics = [], scalar_prefetch = 0 : i64, scratch_operands = 0 : i64, tpu.core_type = #tpu.core_type<tc>} {
    %c0 = arith.constant 0 : index
    %c0_0 = arith.constant 0 : index
    %0 = vector.load %arg0[%c0, %c0_0] : memref<8x32xf32, #tpu.memory_space<vmem>>, vector<8x32xf32>
    %c0_1 = arith.constant 0 : index
    %c0_2 = arith.constant 0 : index
    %1 = vector.load %arg1[%c0_1, %c0_2] : memref<32x2xf32, #tpu.memory_space<vmem>>, vector<32x2xf32>
    %c0_3 = arith.constant 0 : index
    %c0_4 = arith.constant 0 : index
    %2 = vector.load %arg2[%c0_3, %c0_4] : memref<2x32xf32, #tpu.memory_space<vmem>>, vector<2x32xf32>
    %c0_5 = arith.constant 0 : index
    %c0_6 = arith.constant 0 : index
    %3 = vector.load %arg3[%c0_5, %c0_6] : memref<64x8xf32, #tpu.memory_space<vmem>>, vector<64x8xf32>
    %c0_7 = arith.constant 0 : index
    %c0_8 = arith.constant 0 : index
    %4 = vector.load %arg6[%c0_7, %c0_8] : memref<64x8xf32, #tpu.memory_space<vmem>>, vector<64x1xf32>
    %c0_9 = arith.constant 0 : index
    %c1 = arith.constant 1 : index
    %5 = vector.load %arg6[%c0_9, %c1] : memref<64x8xf32, #tpu.memory_space<vmem>>, vector<64x1xf32>
    %cst = arith.constant dense<0.000000e+00> : vector<64x32xf32>
    %6 = tpu.matmul %3, %0, %cst {dimension_numbers = #tpu.dot_dimension_numbers<[1], [0], [0], [1], [0, 0, 1, 1], [], []>} : vector<64x8xf32>, vector<8x32xf32>, vector<64x32xf32> -> vector<64x32xf32>
    %cst_10 = arith.constant dense<0.000000e+00> : vector<64x2xf32>
    %7 = tpu.matmul %6, %1, %cst_10 {dimension_numbers = #tpu.dot_dimension_numbers<[1], [0], [0], [1], [0, 0, 1, 1], [], []>} : vector<64x32xf32>, vector<32x2xf32>, vector<64x2xf32> -> vector<64x2xf32>
    %8 = arith.mulf %6, %6 : vector<64x32xf32>
    %cst_11 = arith.constant dense<0.000000e+00> : vector<64x2xf32>
    %9 = tpu.matmul %8, %1, %cst_11 {dimension_numbers = #tpu.dot_dimension_numbers<[1], [0], [0], [1], [0, 0, 1, 1], [], []>} : vector<64x32xf32>, vector<32x2xf32>, vector<64x2xf32> -> vector<64x2xf32>
    %cst_12 = arith.constant 6.250000e-02 : f32
    %10 = vector.broadcast %cst_12 : f32 to vector<64x2xf32>
    %11 = arith.mulf %7, %10 : vector<64x2xf32>
    %cst_13 = arith.constant 6.250000e-02 : f32
    %12 = vector.broadcast %cst_13 : f32 to vector<64x2xf32>
    %13 = arith.mulf %9, %12 : vector<64x2xf32>
    %14 = arith.mulf %11, %11 : vector<64x2xf32>
    %15 = arith.subf %13, %14 : vector<64x2xf32>
    %cst_14 = arith.constant 0.000000e+00 : f32
    %16 = vector.broadcast %cst_14 : f32 to vector<64x2xf32>
    %17 = arith.maximumf %15, %16 : vector<64x2xf32>
    %cst_15 = arith.constant 1.000000e-03 : f32
    %18 = vector.broadcast %cst_15 : f32 to vector<64x2xf32>
    %19 = arith.addf %17, %18 : vector<64x2xf32>
    %20 = math.rsqrt %19 : vector<64x2xf32>
    %21 = arith.mulf %17, %20 : vector<64x2xf32>
    %22 = arith.mulf %21, %20 : vector<64x2xf32>
    %cst_16 = arith.constant dense<0.000000e+00> : vector<64xf32>
    %23 = vector.multi_reduction <add>, %22, %cst_16 [1] : vector<64x2xf32> to vector<64xf32>
    %24 = vector.shape_cast %23 : vector<64xf32> to vector<64x1xf32>
    %cst_17 = arith.constant 5.000000e-01 : f32
    %25 = vector.broadcast %cst_17 : f32 to vector<64x1xf32>
    %26 = arith.mulf %24, %25 : vector<64x1xf32>
    %cst_18 = arith.constant 9.99999974E-6 : f32
    %27 = vector.broadcast %cst_18 : f32 to vector<64x1xf32>
    %28 = arith.addf %26, %27 : vector<64x1xf32>
    %29 = math.rsqrt %28 : vector<64x1xf32>
    %30 = vector.broadcast %4 : vector<64x1xf32> to vector<64x2xf32>
    %31 = arith.mulf %30, %20 : vector<64x2xf32>
    %32 = vector.broadcast %29 : vector<64x1xf32> to vector<64x2xf32>
    %33 = arith.mulf %31, %32 : vector<64x2xf32>
    %34 = arith.mulf %11, %33 : vector<64x2xf32>
    %35 = vector.broadcast %5 : vector<64x1xf32> to vector<64x2xf32>
    %36 = arith.subf %35, %34 : vector<64x2xf32>
    %cst_19 = arith.constant dense<0.000000e+00> : vector<64x32xf32>
    %37 = tpu.matmul %33, %2, %cst_19 {dimension_numbers = #tpu.dot_dimension_numbers<[1], [0], [0], [1], [0, 0, 1, 1], [], []>} : vector<64x2xf32>, vector<2x32xf32>, vector<64x32xf32> -> vector<64x32xf32>
    %cst_20 = arith.constant dense<0.000000e+00> : vector<64x32xf32>
    %38 = tpu.matmul %36, %2, %cst_20 {dimension_numbers = #tpu.dot_dimension_numbers<[1], [0], [0], [1], [0, 0, 1, 1], [], []>} : vector<64x2xf32>, vector<2x32xf32>, vector<64x32xf32> -> vector<64x32xf32>
    %39 = arith.mulf %6, %37 : vector<64x32xf32>
    %40 = arith.addf %39, %38 : vector<64x32xf32>
    %cst_21 = arith.constant 0.000000e+00 : f32
    %41 = vector.broadcast %cst_21 : f32 to vector<64x32xf32>
    %42 = arith.maximumf %40, %41 : vector<64x32xf32>
    %c0_22 = arith.constant 0 : index
    %c0_23 = arith.constant 0 : index
    %43 = vector.load %arg4[%c0_22, %c0_23] : memref<16x64xf32, #tpu.memory_space<vmem>>, vector<16x64xf32>
    %c0_24 = arith.constant 0 : index
    %c2 = arith.constant 2 : index
    %44 = vector.load %arg6[%c0_24, %c2] : memref<64x8xf32, #tpu.memory_space<vmem>>, vector<16x1xf32>
    %c0_25 = arith.constant 0 : index
    %c3 = arith.constant 3 : index
    %45 = vector.load %arg6[%c0_25, %c3] : memref<64x8xf32, #tpu.memory_space<vmem>>, vector<16x1xf32>
    %cst_26 = arith.constant dense<0.000000e+00> : vector<16x32xf32>
    %46 = tpu.matmul %43, %42, %cst_26 {dimension_numbers = #tpu.dot_dimension_numbers<[1], [0], [0], [1], [0, 0, 1, 1], [], []>} : vector<16x64xf32>, vector<64x32xf32>, vector<16x32xf32> -> vector<16x32xf32>
    %cst_27 = arith.constant dense<0.000000e+00> : vector<16x2xf32>
    %47 = tpu.matmul %46, %1, %cst_27 {dimension_numbers = #tpu.dot_dimension_numbers<[1], [0], [0], [1], [0, 0, 1, 1], [], []>} : vector<16x32xf32>, vector<32x2xf32>, vector<16x2xf32> -> vector<16x2xf32>
    %48 = arith.mulf %46, %46 : vector<16x32xf32>
    %cst_28 = arith.constant dense<0.000000e+00> : vector<16x2xf32>
    %49 = tpu.matmul %48, %1, %cst_28 {dimension_numbers = #tpu.dot_dimension_numbers<[1], [0], [0], [1], [0, 0, 1, 1], [], []>} : vector<16x32xf32>, vector<32x2xf32>, vector<16x2xf32> -> vector<16x2xf32>
    %cst_29 = arith.constant 6.250000e-02 : f32
    %50 = vector.broadcast %cst_29 : f32 to vector<16x2xf32>
    %51 = arith.mulf %47, %50 : vector<16x2xf32>
    %cst_30 = arith.constant 6.250000e-02 : f32
    %52 = vector.broadcast %cst_30 : f32 to vector<16x2xf32>
    %53 = arith.mulf %49, %52 : vector<16x2xf32>
    %54 = arith.mulf %51, %51 : vector<16x2xf32>
    %55 = arith.subf %53, %54 : vector<16x2xf32>
    %cst_31 = arith.constant 0.000000e+00 : f32
    %56 = vector.broadcast %cst_31 : f32 to vector<16x2xf32>
    %57 = arith.maximumf %55, %56 : vector<16x2xf32>
    %cst_32 = arith.constant 1.000000e-03 : f32
    %58 = vector.broadcast %cst_32 : f32 to vector<16x2xf32>
    %59 = arith.addf %57, %58 : vector<16x2xf32>
    %60 = math.rsqrt %59 : vector<16x2xf32>
    %61 = arith.mulf %57, %60 : vector<16x2xf32>
    %62 = arith.mulf %61, %60 : vector<16x2xf32>
    %cst_33 = arith.constant dense<0.000000e+00> : vector<16xf32>
    %63 = vector.multi_reduction <add>, %62, %cst_33 [1] : vector<16x2xf32> to vector<16xf32>
    %64 = vector.shape_cast %63 : vector<16xf32> to vector<16x1xf32>
    %cst_34 = arith.constant 5.000000e-01 : f32
    %65 = vector.broadcast %cst_34 : f32 to vector<16x1xf32>
    %66 = arith.mulf %64, %65 : vector<16x1xf32>
    %cst_35 = arith.constant 9.99999974E-6 : f32
    %67 = vector.broadcast %cst_35 : f32 to vector<16x1xf32>
    %68 = arith.addf %66, %67 : vector<16x1xf32>
    %69 = math.rsqrt %68 : vector<16x1xf32>
    %70 = vector.broadcast %44 : vector<16x1xf32> to vector<16x2xf32>
    %71 = arith.mulf %70, %60 : vector<16x2xf32>
    %72 = vector.broadcast %69 : vector<16x1xf32> to vector<16x2xf32>
    %73 = arith.mulf %71, %72 : vector<16x2xf32>
    %74 = arith.mulf %51, %73 : vector<16x2xf32>
    %75 = vector.broadcast %45 : vector<16x1xf32> to vector<16x2xf32>
    %76 = arith.subf %75, %74 : vector<16x2xf32>
    %cst_36 = arith.constant dense<0.000000e+00> : vector<16x32xf32>
    %77 = tpu.matmul %73, %2, %cst_36 {dimension_numbers = #tpu.dot_dimension_numbers<[1], [0], [0], [1], [0, 0, 1, 1], [], []>} : vector<16x2xf32>, vector<2x32xf32>, vector<16x32xf32> -> vector<16x32xf32>
    %cst_37 = arith.constant dense<0.000000e+00> : vector<16x32xf32>
    %78 = tpu.matmul %76, %2, %cst_37 {dimension_numbers = #tpu.dot_dimension_numbers<[1], [0], [0], [1], [0, 0, 1, 1], [], []>} : vector<16x2xf32>, vector<2x32xf32>, vector<16x32xf32> -> vector<16x32xf32>
    %79 = arith.mulf %46, %77 : vector<16x32xf32>
    %80 = arith.addf %79, %78 : vector<16x32xf32>
    %cst_38 = arith.constant 0.000000e+00 : f32
    %81 = vector.broadcast %cst_38 : f32 to vector<16x32xf32>
    %82 = arith.maximumf %80, %81 : vector<16x32xf32>
    %c0_39 = arith.constant 0 : index
    %c0_40 = arith.constant 0 : index
    %83 = vector.load %arg5[%c0_39, %c0_40] : memref<4x16xf32, #tpu.memory_space<vmem>>, vector<4x16xf32>
    %c0_41 = arith.constant 0 : index
    %c4 = arith.constant 4 : index
    %84 = vector.load %arg6[%c0_41, %c4] : memref<64x8xf32, #tpu.memory_space<vmem>>, vector<4x1xf32>
    %c0_42 = arith.constant 0 : index
    %c5 = arith.constant 5 : index
    %85 = vector.load %arg6[%c0_42, %c5] : memref<64x8xf32, #tpu.memory_space<vmem>>, vector<4x1xf32>
    %cst_43 = arith.constant dense<0.000000e+00> : vector<4x32xf32>
    %86 = tpu.matmul %83, %82, %cst_43 {dimension_numbers = #tpu.dot_dimension_numbers<[1], [0], [0], [1], [0, 0, 1, 1], [], []>} : vector<4x16xf32>, vector<16x32xf32>, vector<4x32xf32> -> vector<4x32xf32>
    %cst_44 = arith.constant dense<0.000000e+00> : vector<4x2xf32>
    %87 = tpu.matmul %86, %1, %cst_44 {dimension_numbers = #tpu.dot_dimension_numbers<[1], [0], [0], [1], [0, 0, 1, 1], [], []>} : vector<4x32xf32>, vector<32x2xf32>, vector<4x2xf32> -> vector<4x2xf32>
    %88 = arith.mulf %86, %86 : vector<4x32xf32>
    %cst_45 = arith.constant dense<0.000000e+00> : vector<4x2xf32>
    %89 = tpu.matmul %88, %1, %cst_45 {dimension_numbers = #tpu.dot_dimension_numbers<[1], [0], [0], [1], [0, 0, 1, 1], [], []>} : vector<4x32xf32>, vector<32x2xf32>, vector<4x2xf32> -> vector<4x2xf32>
    %cst_46 = arith.constant 6.250000e-02 : f32
    %90 = vector.broadcast %cst_46 : f32 to vector<4x2xf32>
    %91 = arith.mulf %87, %90 : vector<4x2xf32>
    %cst_47 = arith.constant 6.250000e-02 : f32
    %92 = vector.broadcast %cst_47 : f32 to vector<4x2xf32>
    %93 = arith.mulf %89, %92 : vector<4x2xf32>
    %94 = arith.mulf %91, %91 : vector<4x2xf32>
    %95 = arith.subf %93, %94 : vector<4x2xf32>
    %cst_48 = arith.constant 0.000000e+00 : f32
    %96 = vector.broadcast %cst_48 : f32 to vector<4x2xf32>
    %97 = arith.maximumf %95, %96 : vector<4x2xf32>
    %cst_49 = arith.constant 1.000000e-03 : f32
    %98 = vector.broadcast %cst_49 : f32 to vector<4x2xf32>
    %99 = arith.addf %97, %98 : vector<4x2xf32>
    %100 = math.rsqrt %99 : vector<4x2xf32>
    %101 = arith.mulf %97, %100 : vector<4x2xf32>
    %102 = arith.mulf %101, %100 : vector<4x2xf32>
    %cst_50 = arith.constant dense<0.000000e+00> : vector<4xf32>
    %103 = vector.multi_reduction <add>, %102, %cst_50 [1] : vector<4x2xf32> to vector<4xf32>
    %104 = vector.shape_cast %103 : vector<4xf32> to vector<4x1xf32>
    %cst_51 = arith.constant 5.000000e-01 : f32
    %105 = vector.broadcast %cst_51 : f32 to vector<4x1xf32>
    %106 = arith.mulf %104, %105 : vector<4x1xf32>
    %cst_52 = arith.constant 9.99999974E-6 : f32
    %107 = vector.broadcast %cst_52 : f32 to vector<4x1xf32>
    %108 = arith.addf %106, %107 : vector<4x1xf32>
    %109 = math.rsqrt %108 : vector<4x1xf32>
    %110 = vector.broadcast %84 : vector<4x1xf32> to vector<4x2xf32>
    %111 = arith.mulf %110, %100 : vector<4x2xf32>
    %112 = vector.broadcast %109 : vector<4x1xf32> to vector<4x2xf32>
    %113 = arith.mulf %111, %112 : vector<4x2xf32>
    %114 = arith.mulf %91, %113 : vector<4x2xf32>
    %115 = vector.broadcast %85 : vector<4x1xf32> to vector<4x2xf32>
    %116 = arith.subf %115, %114 : vector<4x2xf32>
    %cst_53 = arith.constant dense<0.000000e+00> : vector<4x32xf32>
    %117 = tpu.matmul %113, %2, %cst_53 {dimension_numbers = #tpu.dot_dimension_numbers<[1], [0], [0], [1], [0, 0, 1, 1], [], []>} : vector<4x2xf32>, vector<2x32xf32>, vector<4x32xf32> -> vector<4x32xf32>
    %cst_54 = arith.constant dense<0.000000e+00> : vector<4x32xf32>
    %118 = tpu.matmul %116, %2, %cst_54 {dimension_numbers = #tpu.dot_dimension_numbers<[1], [0], [0], [1], [0, 0, 1, 1], [], []>} : vector<4x2xf32>, vector<2x32xf32>, vector<4x32xf32> -> vector<4x32xf32>
    %119 = arith.mulf %86, %117 : vector<4x32xf32>
    %120 = arith.addf %119, %118 : vector<4x32xf32>
    %cst_55 = arith.constant 0.000000e+00 : f32
    %121 = vector.broadcast %cst_55 : f32 to vector<4x32xf32>
    %122 = arith.maximumf %120, %121 : vector<4x32xf32>
    %c0_56 = arith.constant 0 : index
    %c6 = arith.constant 6 : index
    %123 = vector.load %arg6[%c0_56, %c6] : memref<64x8xf32, #tpu.memory_space<vmem>>, vector<4x1xf32>
    %c0_57 = arith.constant 0 : index
    %c7 = arith.constant 7 : index
    %124 = vector.load %arg6[%c0_57, %c7] : memref<64x8xf32, #tpu.memory_space<vmem>>, vector<1x1xf32>
    %125 = vector.broadcast %123 : vector<4x1xf32> to vector<4x32xf32>
    %126 = arith.mulf %122, %125 : vector<4x32xf32>
    %cst_58 = arith.constant dense<0.000000e+00> : vector<32xf32>
    %127 = vector.multi_reduction <add>, %126, %cst_58 [0] : vector<4x32xf32> to vector<32xf32>
    %128 = vector.shape_cast %127 : vector<32xf32> to vector<1x32xf32>
    %129 = vector.broadcast %124 : vector<1x1xf32> to vector<1x32xf32>
    %130 = arith.addf %128, %129 : vector<1x32xf32>
    %c0_59 = arith.constant 0 : index
    %c0_60 = arith.constant 0 : index
    %131 = vector.load %arg7[%c0_59, %c0_60] : memref<1x32xf32, #tpu.memory_space<vmem>>, vector<1x32xf32>
    tpu.vector_store %arg7[%c0_59, %c0_60], %130 {strides = array<i32>} : memref<1x32xf32, #tpu.memory_space<vmem>>, vector<1x32xf32>,
    return
  }
}

</mosaic_0001>

<llo_original>
// kernel: tpu_custom_call.1
$region0: #{tpu_custom_call.1}
  #allocation0 [shape = 'u32[]', space=smem, size = 0x4, offset = 0x4, fixed_abs, tag = 'smem constant byte address 0x4 - core index']
  #allocation1 [shape = 'u32[144,128]{1,0:T(1,128)}', space=vmem, size = 0x12000, scoped, tag = 'internal scratch']
  %s0 = inlined_call_operand.vmem [shape: f32[8,32], index: 0, kind: input, shape index: {}]
  %s1 = inlined_call_operand.vmem [shape: f32[32,2], index: 1, kind: input, shape index: {}]
  %s2 = inlined_call_operand.vmem [shape: f32[2,32], index: 2, kind: input, shape index: {}]
  %s3 = inlined_call_operand.vmem [shape: f32[64,8], index: 3, kind: input, shape index: {}]
  %s4 = inlined_call_operand.vmem [shape: f32[16,64], index: 4, kind: input, shape index: {}]
  %s5 = inlined_call_operand.vmem [shape: f32[4,16], index: 5, kind: input, shape index: {}]
  %s6 = inlined_call_operand.vmem [shape: f32[64,8], index: 6, kind: input, shape index: {}]
  %s7 = inlined_call_operand.hbm [shape: f32[1,32], index: 7, kind: output, shape index: {}]
  %s8 = sld [smem:[#allocation0]]
  $region38: #{tpu_custom_call.1} parent=0
    _
  %s10 = ssub.s32 1, %s8
  %s11 = scalar_select 0, %s10, %s8
  $region1: #{tpu_custom_call.1} parent=0
    #allocation2 [shape = 'u8[512]{0}', space=vmem, size = 0x400, scoped, tag = 'output window, operand 0, single buffered']
    #allocation3 [shape = 's32[1]{0}', space=sflag, size = 0x4, scoped, tag = 'scoped memory for tpu_custom_call.1']
    %12 = vsyncpa [#allocation3], 0
    // Predicated region
    $region2: #{tpu_custom_call.1} parent=1 // pred_check
      _
    $region3: #{tpu_custom_call.1} parent=1 // pred_check_branch
      %14 = sbr.rel (0) target = $region5
    $region4: #{tpu_custom_call.1} parent=1 // pred_region
      _
    $region5: #{tpu_custom_call.1} parent=1 // pred_fallthru
      _
    // Predicated region
    $region6: #{tpu_custom_call.1} parent=1 // pred_check
      _
    $region7: #{tpu_custom_call.1} parent=1 // pred_check_branch
      %16 = sbr.rel (0) target = $region9
    $region8: #{tpu_custom_call.1} parent=1 // pred_region
      _
    $region9: #{tpu_custom_call.1} parent=1 // pred_fallthru
      _
    // Predicated region
    $region10: #{tpu_custom_call.1} parent=1 // pred_check
      _
    $region11: #{tpu_custom_call.1} parent=1 // pred_check_branch
      %18 = sbr.rel (0) target = $region13
    $region12: #{tpu_custom_call.1} parent=1 // pred_region
      _
    $region13: #{tpu_custom_call.1} parent=1 // pred_fallthru
      _
    // Predicated region
    $region14: #{tpu_custom_call.1} parent=1 // pred_check
      _
    $region15: #{tpu_custom_call.1} parent=1 // pred_check_branch
      %20 = sbr.rel (0) target = $region17
    $region16: #{tpu_custom_call.1} parent=1 // pred_region
      _
    $region17: #{tpu_custom_call.1} parent=1 // pred_fallthru
      _
    // Predicated region
    $region18: #{tpu_custom_call.1} parent=1 // pred_check
      _
    $region19: #{tpu_custom_call.1} parent=1 // pred_check_branch
      %22 = sbr.rel (0) target = $region21
    $region20: #{tpu_custom_call.1} parent=1 // pred_region
      _
    $region21: #{tpu_custom_call.1} parent=1 // pred_fallthru
      _
    // Predicated region
    $region22: #{tpu_custom_call.1} parent=1 // pred_check
      _
    $region23: #{tpu_custom_call.1} parent=1 // pred_check_branch
      %24 = sbr.rel (0) target = $region25
    $region24: #{tpu_custom_call.1} parent=1 // pred_region
      _
    $region25: #{tpu_custom_call.1} parent=1 // pred_fallthru
      _
    // Predicated region
    $region26: #{tpu_custom_call.1} parent=1 // pred_check
      _
    $region27: #{tpu_custom_call.1} parent=1 // pred_check_branch
      %26 = sbr.rel (0) target = $region29
    $region28: #{tpu_custom_call.1} parent=1 // pred_region
      _
    $region29: #{tpu_custom_call.1} parent=1 // pred_fallthru
      _
    %v27 = vld [vmem:[%s0] sm:$0xff]
    %v28 = vld [vmem:[%s1] sm:$0xff]
    %v29 = vld [vmem:[%s1 + $0x8] sm:$0xff]
    %v30 = vld [vmem:[%s1 + $0x10] sm:$0xff]
    %v31 = vld [vmem:[%s1 + $0x18] sm:$0xff]
    %v32 = vld [vmem:[%s2] sm:$0x3]
    %v33 = vld [vmem:[%s3] sm:$0xff]
    %v34 = vld [vmem:[%s3 + $0x8] sm:$0xff]
    %v35 = vld [vmem:[%s3 + $0x10] sm:$0xff]
    %v36 = vld [vmem:[%s3 + $0x18] sm:$0xff]
    %v37 = vld [vmem:[%s3 + $0x20] sm:$0xff]
    %v38 = vld [vmem:[%s3 + $0x28] sm:$0xff]
    %v39 = vld [vmem:[%s3 + $0x30] sm:$0xff]
    %v40 = vld [vmem:[%s3 + $0x38] sm:$0xff]
    %v41 = vld [vmem:[%s6] sm:$0xff]
    %v42 = vld [vmem:[%s6 + $0x8] sm:$0xff]
    %v43 = vld [vmem:[%s6 + $0x10] sm:$0xff]
    %v44 = vld [vmem:[%s6 + $0x18] sm:$0xff]
    %v45 = vld [vmem:[%s6 + $0x20] sm:$0xff]
    %v46 = vld [vmem:[%s6 + $0x28] sm:$0xff]
    %v47 = vld [vmem:[%s6 + $0x30] sm:$0xff]
    %v48 = vld [vmem:[%s6 + $0x38] sm:$0xff]
    %vm49 = vcmask 64512
    %v51 = vsel %vm49, %v33, 0
    %v54 = vsel %vm49, %v34, 0
    %v57 = vsel %vm49, %v35, 0
    %v60 = vsel %vm49, %v36, 0
    %v63 = vsel %vm49, %v37, 0
    %v66 = vsel %vm49, %v38, 0
    %v69 = vsel %vm49, %v39, 0
    %v72 = vsel %vm49, %v40, 0
    %74 = vmatprep.subr.mxu0 0.0
    %75 = vmatpush1.msra.mxu0 0.0
    %76 = vmatprep.subr.mxu0 0.0
    %77 = vmatpush1.msra.mxu0 0.0
    %78 = vmatprep.subr.mxu0 0.0
    %79 = vmatpush1.msra.mxu0 0.0
    %80 = vmatprep.subr.mxu0 0.0
    %81 = vmatpush1.msra.mxu0 0.0
    %82 = vmatprep.subr.mxu0 0.0
    %83 = vmatpush1.msra.mxu0 0.0
    %84 = vmatprep.subr.mxu0 0.0
    %85 = vmatpush1.msra.mxu0 0.0
    %86 = vmatprep.subr.mxu0 0.0
    %87 = vmatpush1.msra.mxu0 0.0
    %88 = vmatprep.subr.mxu0 0.0
    %89 = vmatpush1.msra.mxu0 0.0
    %90 = vmatprep.subr.mxu0 0.0
    %91 = vmatpush1.msra.mxu0 0.0
    %92 = vmatprep.subr.mxu0 0.0
    %93 = vmatpush1.msra.mxu0 0.0
    %94 = vmatprep.subr.mxu0 0.0
    %95 = vmatpush1.msra.mxu0 0.0
    %96 = vmatprep.subr.mxu0 0.0
    %97 = vmatpush1.msra.mxu0 0.0
    %98 = vmatprep.subr.mxu0 0.0
    %99 = vmatpush1.msra.mxu0 0.0
    %100 = vmatprep.subr.mxu0 0.0
    %101 = vmatpush1.msra.mxu0 0.0
    %102 = vmatprep.subr.mxu0 0.0
    %103 = vmatpush1.msra.mxu0 0.0
    %104 = vmatprep.subr.mxu0 0.0
    %105 = vmatpush1.msra.mxu0 %v27
    %106 = vmatprep.subr.mxu0 0.0
    %107 = vmatpush2.msra.mxu0 0.0
    %108 = vmatprep.subr.mxu0 0.0
    %109 = vmatpush2.msra.mxu0 0.0
    %110 = vmatprep.subr.mxu0 0.0
    %111 = vmatpush2.msra.mxu0 0.0
    %112 = vmatprep.subr.mxu0 0.0
    %113 = vmatpush2.msra.mxu0 0.0
    %114 = vmatprep.subr.mxu0 0.0
    %115 = vmatpush2.msra.mxu0 0.0
    %116 = vmatprep.subr.mxu0 0.0
    %117 = vmatpush2.msra.mxu0 0.0
    %118 = vmatprep.subr.mxu0 0.0
    %119 = vmatpush2.msra.mxu0 0.0
    %120 = vmatprep.subr.mxu0 0.0
    %121 = vmatpush2.msra.mxu0 0.0
    %122 = vmatprep.subr.mxu0 0.0
    %123 = vmatpush2.msra.mxu0 0.0
    %124 = vmatprep.subr.mxu0 0.0
    %125 = vmatpush2.msra.mxu0 0.0
    %126 = vmatprep.subr.mxu0 0.0
    %127 = vmatpush2.msra.mxu0 0.0
    %128 = vmatprep.subr.mxu0 0.0
    %129 = vmatpush2.msra.mxu0 0.0
    %130 = vmatprep.subr.mxu0 0.0
    %131 = vmatpush2.msra.mxu0 0.0
    %132 = vmatprep.subr.mxu0 0.0
    %133 = vmatpush2.msra.mxu0 0.0
    %134 = vmatprep.subr.mxu0 0.0
    %135 = vmatpush2.msra.mxu0 0.0
    %136 = vmatprep.subr.mxu0 0.0
    %137 = vmatpush2.msra.mxu0 0.0
    %138 = vmatprep.mubr.f32.mxu0 0.0
    %139 = vmatmul.mubr.f32.gmra.mxu0 %v51
    %v140 = vpop.f32.mrf.mxu0
    %v141 = vadd.f32 0.0, %v140
    %v142 = vpop.f32.mrf.mxu0
    %143 = vmatprep.mubr.f32.mxu0 0.0
    %144 = vmatmul.mubr.f32.gmra.mxu0 %v54
    %v145 = vpop.f32.mrf.mxu0
    %v146 = vadd.f32 0.0, %v145
    %v147 = vpop.f32.mrf.mxu0
    %148 = vmatprep.mubr.f32.mxu0 0.0
    %149 = vmatmul.mubr.f32.gmra.mxu0 %v57
    %v150 = vpop.f32.mrf.mxu0
    %v151 = vadd.f32 0.0, %v150
    %v152 = vpop.f32.mrf.mxu0
    %153 = vmatprep.mubr.f32.mxu0 0.0
    %154 = vmatmul.mubr.f32.gmra.mxu0 %v60
    %v155 = vpop.f32.mrf.mxu0
    %v156 = vadd.f32 0.0, %v155
    %v157 = vpop.f32.mrf.mxu0
    %158 = vmatprep.mubr.f32.mxu0 0.0
    %159 = vmatmul.mubr.f32.gmra.mxu0 %v63
    %v160 = vpop.f32.mrf.mxu0
    %v161 = vadd.f32 0.0, %v160
    %v162 = vpop.f32.mrf.mxu0
    %163 = vmatprep.mubr.f32.mxu0 0.0
    %164 = vmatmul.mubr.f32.gmra.mxu0 %v66
    %v165 = vpop.f32.mrf.mxu0
    %v166 = vadd.f32 0.0, %v165
    %v167 = vpop.f32.mrf.mxu0
    %168 = vmatprep.mubr.f32.mxu0 0.0
    %169 = vmatmul.mubr.f32.gmra.mxu0 %v69
    %v170 = vpop.f32.mrf.mxu0
    %v171 = vadd.f32 0.0, %v170
    %v172 = vpop.f32.mrf.mxu0
    %173 = vmatprep.mubr.f32.mxu0 0.0
    %174 = vmatmul.mubr.f32.gmra.mxu0 %v72
    %v175 = vpop.f32.mrf.mxu0
    %v176 = vadd.f32 0.0, %v175
    %v177 = vpop.f32.mrf.mxu0
    %178 = vdwg.mxu0
    %vm179 = vcmask 261120
    %v181 = vsel %vm179, %v141, 0
    %v184 = vsel %vm179, %v146, 0
    %v187 = vsel %vm179, %v151, 0
    %v190 = vsel %vm179, %v156, 0
    %v193 = vsel %vm179, %v161, 0
    %v196 = vsel %vm179, %v166, 0
    %v199 = vsel %vm179, %v171, 0
    %v202 = vsel %vm179, %v176, 0
    %204 = vmatprep.subr.mxu0 0.0
    %205 = vmatpush1.msra.mxu0 0.0
    %206 = vmatprep.subr.mxu0 0.0
    %207 = vmatpush1.msra.mxu0 0.0
    %208 = vmatprep.subr.mxu0 0.0
    %209 = vmatpush1.msra.mxu0 0.0
    %210 = vmatprep.subr.mxu0 0.0
    %211 = vmatpush1.msra.mxu0 0.0
    %212 = vmatprep.subr.mxu0 0.0
    %213 = vmatpush1.msra.mxu0 0.0
    %214 = vmatprep.subr.mxu0 0.0
    %215 = vmatpush1.msra.mxu0 0.0
    %216 = vmatprep.subr.mxu0 0.0
    %217 = vmatpush1.msra.mxu0 0.0
    %218 = vmatprep.subr.mxu0 0.0
    %219 = vmatpush1.msra.mxu0 0.0
    %220 = vmatprep.subr.mxu0 0.0
    %221 = vmatpush1.msra.mxu0 0.0
    %222 = vmatprep.subr.mxu0 0.0
    %223 = vmatpush1.msra.mxu0 0.0
    %224 = vmatprep.subr.mxu0 0.0
    %225 = vmatpush1.msra.mxu0 0.0
    %226 = vmatprep.subr.mxu0 0.0
    %227 = vmatpush1.msra.mxu0 0.0
    %228 = vmatprep.subr.mxu0 0.0
    %229 = vmatpush1.msra.mxu0 %v31
    %230 = vmatprep.subr.mxu0 0.0
    %231 = vmatpush1.msra.mxu0 %v30
    %232 = vmatprep.subr.mxu0 0.0
    %233 = vmatpush1.msra.mxu0 %v29
    %234 = vmatprep.subr.mxu0 0.0
    %235 = vmatpush1.msra.mxu0 %v28
    %236 = vmatprep.subr.mxu0 0.0
    %237 = vmatpush2.msra.mxu0 0.0
    %238 = vmatprep.subr.mxu0 0.0
    %239 = vmatpush2.msra.mxu0 0.0
    %240 = vmatprep.subr.mxu0 0.0
    %241 = vmatpush2.msra.mxu0 0.0
    %242 = vmatprep.subr.mxu0 0.0
    %243 = vmatpush2.msra.mxu0 0.0
    %244 = vmatprep.subr.mxu0 0.0
    %245 = vmatpush2.msra.mxu0 0.0
    %246 = vmatprep.subr.mxu0 0.0
    %247 = vmatpush2.msra.mxu0 0.0
    %248 = vmatprep.subr.mxu0 0.0
    %249 = vmatpush2.msra.mxu0 0.0
    %250 = vmatprep.subr.mxu0 0.0
    %251 = vmatpush2.msra.mxu0 0.0
    %252 = vmatprep.subr.mxu0 0.0
    %253 = vmatpush2.msra.mxu0 0.0
    %254 = vmatprep.subr.mxu0 0.0
    %255 = vmatpush2.msra.mxu0 0.0
    %256 = vmatprep.subr.mxu0 0.0
    %257 = vmatpush2.msra.mxu0 0.0
    %258 = vmatprep.subr.mxu0 0.0
    %259 = vmatpush2.msra.mxu0 0.0
    %260 = vmatprep.subr.mxu0 0.0
    %261 = vmatpush2.msra.mxu0 0.0
    %262 = vmatprep.subr.mxu0 0.0
    %263 = vmatpush2.msra.mxu0 0.0
    %264 = vmatprep.subr.mxu0 0.0
    %265 = vmatpush2.msra.mxu0 0.0
    %266 = vmatprep.subr.mxu0 0.0
    %267 = vmatpush2.msra.mxu0 0.0
    %268 = vmatprep.mubr.f32.mxu0 0.0
    %269 = vmatmul.mubr.f32.gmra.mxu0 %v181
    %v270 = vpop.f32.mrf.mxu0
    %v271 = vadd.f32 0.0, %v270
    %v272 = vpop.f32.mrf.mxu0
    %273 = vmatprep.mubr.f32.mxu0 0.0
    %274 = vmatmul.mubr.f32.gmra.mxu0 %v184
    %v275 = vpop.f32.mrf.mxu0
    %v276 = vadd.f32 0.0, %v275
    %v277 = vpop.f32.mrf.mxu0
    %278 = vmatprep.mubr.f32.mxu0 0.0
    %279 = vmatmul.mubr.f32.gmra.mxu0 %v187
    %v280 = vpop.f32.mrf.mxu0
    %v281 = vadd.f32 0.0, %v280
    %v282 = vpop.f32.mrf.mxu0
    %283 = vmatprep.mubr.f32.mxu0 0.0
    %284 = vmatmul.mubr.f32.gmra.mxu0 %v190
    %v285 = vpop.f32.mrf.mxu0
    %v286 = vadd.f32 0.0, %v285
    %v287 = vpop.f32.mrf.mxu0
    %288 = vmatprep.mubr.f32.mxu0 0.0
    %289 = vmatmul.mubr.f32.gmra.mxu0 %v193
    %v290 = vpop.f32.mrf.mxu0
    %v291 = vadd.f32 0.0, %v290
    %v292 = vpop.f32.mrf.mxu0
    %293 = vmatprep.mubr.f32.mxu0 0.0
    %294 = vmatmul.mubr.f32.gmra.mxu0 %v196
    %v295 = vpop.f32.mrf.mxu0
    %v296 = vadd.f32 0.0, %v295
    %v297 = vpop.f32.mrf.mxu0
    %298 = vmatprep.mubr.f32.mxu0 0.0
    %299 = vmatmul.mubr.f32.gmra.mxu0 %v199
    %v300 = vpop.f32.mrf.mxu0
    %v301 = vadd.f32 0.0, %v300
    %v302 = vpop.f32.mrf.mxu0
    %303 = vmatprep.mubr.f32.mxu0 0.0
    %304 = vmatmul.mubr.f32.gmra.mxu0 %v202
    %v305 = vpop.f32.mrf.mxu0
    %v306 = vadd.f32 0.0, %v305
    %v307 = vpop.f32.mrf.mxu0
    %308 = vdwg.mxu0
    %v309 = vmul.f32 %v141, %v141
    %v310 = vmul.f32 %v146, %v146
    %v311 = vmul.f32 %v151, %v151
    %v312 = vmul.f32 %v156, %v156
    %v313 = vmul.f32 %v161, %v161
    %v314 = vmul.f32 %v166, %v166
    %v315 = vmul.f32 %v171, %v171
    %v316 = vmul.f32 %v176, %v176
    %v318 = vsel %vm179, %v309, 0
    %v321 = vsel %vm179, %v310, 0
    %v324 = vsel %vm179, %v311, 0
    %v327 = vsel %vm179, %v312, 0
    %v330 = vsel %vm179, %v313, 0
    %v333 = vsel %vm179, %v314, 0
    %v336 = vsel %vm179, %v315, 0
    %v339 = vsel %vm179, %v316, 0
    %341 = vmatprep.subr.mxu0 0.0
    %342 = vmatpush1.msra.mxu0 0.0
    %343 = vmatprep.subr.mxu0 0.0
    %344 = vmatpush1.msra.mxu0 0.0
    %345 = vmatprep.subr.mxu0 0.0
    %346 = vmatpush1.msra.mxu0 0.0
    %347 = vmatprep.subr.mxu0 0.0
    %348 = vmatpush1.msra.mxu0 0.0
    %349 = vmatprep.subr.mxu0 0.0
    %350 = vmatpush1.msra.mxu0 0.0
    %351 = vmatprep.subr.mxu0 0.0
    %352 = vmatpush1.msra.mxu0 0.0
    %353 = vmatprep.subr.mxu0 0.0
    %354 = vmatpush1.msra.mxu0 0.0
    %355 = vmatprep.subr.mxu0 0.0
    %356 = vmatpush1.msra.mxu0 0.0
    %357 = vmatprep.subr.mxu0 0.0
    %358 = vmatpush1.msra.mxu0 0.0
    %359 = vmatprep.subr.mxu0 0.0
    %360 = vmatpush1.msra.mxu0 0.0
    %361 = vmatprep.subr.mxu0 0.0
    %362 = vmatpush1.msra.mxu0 0.0
    %363 = vmatprep.subr.mxu0 0.0
    %364 = vmatpush1.msra.mxu0 0.0
    %365 = vmatprep.subr.mxu0 0.0
    %366 = vmatpush1.msra.mxu0 %v31
    %367 = vmatprep.subr.mxu0 0.0
    %368 = vmatpush1.msra.mxu0 %v30
    %369 = vmatprep.subr.mxu0 0.0
    %370 = vmatpush1.msra.mxu0 %v29
    %371 = vmatprep.subr.mxu0 0.0
    %372 = vmatpush1.msra.mxu0 %v28
    %373 = vmatprep.subr.mxu0 0.0
    %374 = vmatpush2.msra.mxu0 0.0
    %375 = vmatprep.subr.mxu0 0.0
    %376 = vmatpush2.msra.mxu0 0.0
    %377 = vmatprep.subr.mxu0 0.0
    %378 = vmatpush2.msra.mxu0 0.0
    %379 = vmatprep.subr.mxu0 0.0
    %380 = vmatpush2.msra.mxu0 0.0
    %381 = vmatprep.subr.mxu0 0.0
    %382 = vmatpush2.msra.mxu0 0.0
    %383 = vmatprep.subr.mxu0 0.0
    %384 = vmatpush2.msra.mxu0 0.0
    %385 = vmatprep.subr.mxu0 0.0
    %386 = vmatpush2.msra.mxu0 0.0
    %387 = vmatprep.subr.mxu0 0.0
    %388 = vmatpush2.msra.mxu0 0.0
    %389 = vmatprep.subr.mxu0 0.0
    %390 = vmatpush2.msra.mxu0 0.0
    %391 = vmatprep.subr.mxu0 0.0
    %392 = vmatpush2.msra.mxu0 0.0
    %393 = vmatprep.subr.mxu0 0.0
    %394 = vmatpush2.msra.mxu0 0.0
    %395 = vmatprep.subr.mxu0 0.0
    %396 = vmatpush2.msra.mxu0 0.0
    %397 = vmatprep.subr.mxu0 0.0
    %398 = vmatpush2.msra.mxu0 0.0
    %399 = vmatprep.subr.mxu0 0.0
    %400 = vmatpush2.msra.mxu0 0.0
    %401 = vmatprep.subr.mxu0 0.0
    %402 = vmatpush2.msra.mxu0 0.0
    %403 = vmatprep.subr.mxu0 0.0
    %404 = vmatpush2.msra.mxu0 0.0
    %405 = vmatprep.mubr.f32.mxu0 0.0
    %406 = vmatmul.mubr.f32.gmra.mxu0 %v318
    %v407 = vpop.f32.mrf.mxu0
    %v408 = vadd.f32 0.0, %v407
    %v409 = vpop.f32.mrf.mxu0
    %410 = vmatprep.mubr.f32.mxu0 0.0
    %411 = vmatmul.mubr.f32.gmra.mxu0 %v321
    %v412 = vpop.f32.mrf.mxu0
    %v413 = vadd.f32 0.0, %v412
    %v414 = vpop.f32.mrf.mxu0
    %415 = vmatprep.mubr.f32.mxu0 0.0
    %416 = vmatmul.mubr.f32.gmra.mxu0 %v324
    %v417 = vpop.f32.mrf.mxu0
    %v418 = vadd.f32 0.0, %v417
    %v419 = vpop.f32.mrf.mxu0
    %420 = vmatprep.mubr.f32.mxu0 0.0
    %421 = vmatmul.mubr.f32.gmra.mxu0 %v327
    %v422 = vpop.f32.mrf.mxu0
    %v423 = vadd.f32 0.0, %v422
    %v424 = vpop.f32.mrf.mxu0
    %425 = vmatprep.mubr.f32.mxu0 0.0
    %426 = vmatmul.mubr.f32.gmra.mxu0 %v330
    %v427 = vpop.f32.mrf.mxu0
    %v428 = vadd.f32 0.0, %v427
    %v429 = vpop.f32.mrf.mxu0
    %430 = vmatprep.mubr.f32.mxu0 0.0
    %431 = vmatmul.mubr.f32.gmra.mxu0 %v333
    %v432 = vpop.f32.mrf.mxu0
    %v433 = vadd.f32 0.0, %v432
    %v434 = vpop.f32.mrf.mxu0
    %435 = vmatprep.mubr.f32.mxu0 0.0
    %436 = vmatmul.mubr.f32.gmra.mxu0 %v336
    %v437 = vpop.f32.mrf.mxu0
    %v438 = vadd.f32 0.0, %v437
    %v439 = vpop.f32.mrf.mxu0
    %440 = vmatprep.mubr.f32.mxu0 0.0
    %441 = vmatmul.mubr.f32.gmra.mxu0 %v339
    %v442 = vpop.f32.mrf.mxu0
    %v443 = vadd.f32 0.0, %v442
    %v444 = vpop.f32.mrf.mxu0
    %445 = vdwg.mxu0
    %v446 = vmul.f32 %v271, 0.0625
    %v447 = vmul.f32 %v276, 0.0625
    %v448 = vmul.f32 %v281, 0.0625
    %v449 = vmul.f32 %v286, 0.0625
    %v450 = vmul.f32 %v291, 0.0625
    %v451 = vmul.f32 %v296, 0.0625
    %v452 = vmul.f32 %v301, 0.0625
    %v453 = vmul.f32 %v306, 0.0625
    %v454 = vmul.f32 %v408, 0.0625
    %v455 = vmul.f32 %v413, 0.0625
    %v456 = vmul.f32 %v418, 0.0625
    %v457 = vmul.f32 %v423, 0.0625
    %v458 = vmul.f32 %v428, 0.0625
    %v459 = vmul.f32 %v433, 0.0625
    %v460 = vmul.f32 %v438, 0.0625
    %v461 = vmul.f32 %v443, 0.0625
    %v462 = vmul.f32 %v446, %v446
    %v463 = vmul.f32 %v447, %v447
    %v464 = vmul.f32 %v448, %v448
    %v465 = vmul.f32 %v449, %v449
    %v466 = vmul.f32 %v450, %v450
    %v467 = vmul.f32 %v451, %v451
    %v468 = vmul.f32 %v452, %v452
    %v469 = vmul.f32 %v453, %v453
    %v470 = vsub.f32 %v454, %v462
    %v471 = vsub.f32 %v455, %v463
    %v472 = vsub.f32 %v456, %v464
    %v473 = vsub.f32 %v457, %v465
    %v474 = vsub.f32 %v458, %v466
    %v475 = vsub.f32 %v459, %v467
    %v476 = vsub.f32 %v460, %v468
    %v477 = vsub.f32 %v461, %v469
    %v478 = vmax.f32 %v470, 0.0
    %v479 = vmax.f32 %v471, 0.0
    %v480 = vmax.f32 %v472, 0.0
    %v481 = vmax.f32 %v473, 0.0
    %v482 = vmax.f32 %v474, 0.0
    %v483 = vmax.f32 %v475, 0.0
    %v484 = vmax.f32 %v476, 0.0
    %v485 = vmax.f32 %v477, 0.0
    %v486 = vadd.f32 %v478, 0.001
    %v487 = vadd.f32 %v479, 0.001
    %v488 = vadd.f32 %v480, 0.001
    %v489 = vadd.f32 %v481, 0.001
    %v490 = vadd.f32 %v482, 0.001
    %v491 = vadd.f32 %v483, 0.001
    %v492 = vadd.f32 %v484, 0.001
    %v493 = vadd.f32 %v485, 0.001
    %v494 = vrsqrt.pop %v486
    %v495 = vrsqrt.pop %v487
    %v496 = vrsqrt.pop %v488
    %v497 = vrsqrt.pop %v489
    %v498 = vrsqrt.pop %v490
    %v499 = vrsqrt.pop %v491
    %v500 = vrsqrt.pop %v492
    %v501 = vrsqrt.pop %v493
    %v502 = vmul.f32 %v478, %v494
    %v503 = vmul.f32 %v479, %v495
    %v504 = vmul.f32 %v480, %v496
    %v505 = vmul.f32 %v481, %v497
    %v506 = vmul.f32 %v482, %v498
    %v507 = vmul.f32 %v483, %v499
    %v508 = vmul.f32 %v484, %v500
    %v509 = vmul.f32 %v485, %v501
    %v510 = vmul.f32 %v502, %v494
    %v511 = vmul.f32 %v503, %v495
    %v512 = vmul.f32 %v504, %v496
    %v513 = vmul.f32 %v505, %v497
    %v514 = vmul.f32 %v506, %v498
    %v515 = vmul.f32 %v507, %v499
    %v516 = vmul.f32 %v508, %v500
    %v517 = vmul.f32 %v509, %v501
    %vm518 = vcmask 15360
    %v519 = vsel %vm518, %v510, 0.0
    %520 = vadd.xlane.f32.xlu0 %v519
    %v521 = vpop.xlane.xlu0 %520
    %v522 = vsel %vm518, %v511, 0.0
    %523 = vadd.xlane.f32.xlu0 %v522
    %v524 = vpop.xlane.xlu0 %523
    %v525 = vsel %vm518, %v512, 0.0
    %526 = vadd.xlane.f32.xlu0 %v525
    %v527 = vpop.xlane.xlu0 %526
    %v528 = vsel %vm518, %v513, 0.0
    %529 = vadd.xlane.f32.xlu0 %v528
    %v530 = vpop.xlane.xlu0 %529
    %v531 = vsel %vm518, %v514, 0.0
    %532 = vadd.xlane.f32.xlu0 %v531
    %v533 = vpop.xlane.xlu0 %532
    %v534 = vsel %vm518, %v515, 0.0
    %535 = vadd.xlane.f32.xlu0 %v534
    %v536 = vpop.xlane.xlu0 %535
    %v537 = vsel %vm518, %v516, 0.0
    %538 = vadd.xlane.f32.xlu0 %v537
    %v539 = vpop.xlane.xlu0 %538
    %v540 = vsel %vm518, %v517, 0.0
    %541 = vadd.xlane.f32.xlu0 %v540
    %v542 = vpop.xlane.xlu0 %541
    %v543 = vmul.f32 %v521, 0.5
    %v544 = vmul.f32 %v524, 0.5
    %v545 = vmul.f32 %v527, 0.5
    %v546 = vmul.f32 %v530, 0.5
    %v547 = vmul.f32 %v533, 0.5
    %v548 = vmul.f32 %v536, 0.5
    %v549 = vmul.f32 %v539, 0.5
    %v550 = vmul.f32 %v542, 0.5
    %v551 = vadd.f32 %v543, 1e-05
    %v552 = vadd.f32 %v544, 1e-05
    %v553 = vadd.f32 %v545, 1e-05
    %v554 = vadd.f32 %v546, 1e-05
    %v555 = vadd.f32 %v547, 1e-05
    %v556 = vadd.f32 %v548, 1e-05
    %v557 = vadd.f32 %v549, 1e-05
    %v558 = vadd.f32 %v550, 1e-05
    %v559 = vrsqrt.pop %v551
    %v560 = vrsqrt.pop %v552
    %v561 = vrsqrt.pop %v553
    %v562 = vrsqrt.pop %v554
    %v563 = vrsqrt.pop %v555
    %v564 = vrsqrt.pop %v556
    %v565 = vrsqrt.pop %v557
    %v566 = vrsqrt.pop %v558
    %568 = vset.pattern.permute.xlu0 0
    %569 = vperm.xlu0 %568, %v41
    %v570 = vpop.permute.xlu0 %569
    %573 = vset.pattern.permute.xlu0 0
    %574 = vperm.xlu0 %573, %v42
    %v575 = vpop.permute.xlu0 %574
    %578 = vset.pattern.permute.xlu0 0
    %579 = vperm.xlu0 %578, %v43
    %v580 = vpop.permute.xlu0 %579
    %583 = vset.pattern.permute.xlu0 0
    %584 = vperm.xlu0 %583, %v44
    %v585 = vpop.permute.xlu0 %584
    %588 = vset.pattern.permute.xlu0 0
    %589 = vperm.xlu0 %588, %v45
    %v590 = vpop.permute.xlu0 %589
    %593 = vset.pattern.permute.xlu0 0
    %594 = vperm.xlu0 %593, %v46
    %v595 = vpop.permute.xlu0 %594
    %598 = vset.pattern.permute.xlu0 0
    %599 = vperm.xlu0 %598, %v47
    %v600 = vpop.permute.xlu0 %599
    %603 = vset.pattern.permute.xlu0 0
    %604 = vperm.xlu0 %603, %v48
    %v605 = vpop.permute.xlu0 %604
    %v607 = vmul.f32 %v570, %v494
    %v608 = vmul.f32 %v575, %v495
    %v609 = vmul.f32 %v580, %v496
    %v610 = vmul.f32 %v585, %v497
    %v611 = vmul.f32 %v590, %v498
    %v612 = vmul.f32 %v595, %v499
    %v613 = vmul.f32 %v600, %v500
    %v614 = vmul.f32 %v605, %v501
    %v615 = vmul.f32 %v607, %v559
    %v616 = vmul.f32 %v608, %v560
    %v617 = vmul.f32 %v609, %v561
    %v618 = vmul.f32 %v610, %v562
    %v619 = vmul.f32 %v611, %v563
    %v620 = vmul.f32 %v612, %v564
    %v621 = vmul.f32 %v613, %v565
    %v622 = vmul.f32 %v614, %v566
    %v623 = vmul.f32 %v446, %v615
    %v624 = vmul.f32 %v447, %v616
    %v625 = vmul.f32 %v448, %v617
    %v626 = vmul.f32 %v449, %v618
    %v627 = vmul.f32 %v450, %v619
    %v628 = vmul.f32 %v451, %v620
    %v629 = vmul.f32 %v452, %v621
    %v630 = vmul.f32 %v453, %v622
    %631 = vset.pattern.permute.xlu0 1
    %632 = vperm.xlu0 %631, %v41
    %v633 = vpop.permute.xlu0 %632
    %635 = vset.pattern.permute.xlu0 1
    %636 = vperm.xlu0 %635, %v42
    %v637 = vpop.permute.xlu0 %636
    %639 = vset.pattern.permute.xlu0 1
    %640 = vperm.xlu0 %639, %v43
    %v641 = vpop.permute.xlu0 %640
    %643 = vset.pattern.permute.xlu0 1
    %644 = vperm.xlu0 %643, %v44
    %v645 = vpop.permute.xlu0 %644
    %647 = vset.pattern.permute.xlu0 1
    %648 = vperm.xlu0 %647, %v45
    %v649 = vpop.permute.xlu0 %648
    %651 = vset.pattern.permute.xlu0 1
    %652 = vperm.xlu0 %651, %v46
    %v653 = vpop.permute.xlu0 %652
    %655 = vset.pattern.permute.xlu0 1
    %656 = vperm.xlu0 %655, %v47
    %v657 = vpop.permute.xlu0 %656
    %659 = vset.pattern.permute.xlu0 1
    %660 = vperm.xlu0 %659, %v48
    %v661 = vpop.permute.xlu0 %660
    %v663 = vsub.f32 %v633, %v623
    %v664 = vsub.f32 %v637, %v624
    %v665 = vsub.f32 %v641, %v625
    %v666 = vsub.f32 %v645, %v626
    %v667 = vsub.f32 %v649, %v627
    %v668 = vsub.f32 %v653, %v628
    %v669 = vsub.f32 %v657, %v629
    %v670 = vsub.f32 %v661, %v630
    %v672 = vsel %vm518, %v615, 0
    %v675 = vsel %vm518, %v616, 0
    %v678 = vsel %vm518, %v617, 0
    %v681 = vsel %vm518, %v618, 0
    %v684 = vsel %vm518, %v619, 0
    %v687 = vsel %vm518, %v620, 0
    %v690 = vsel %vm518, %v621, 0
    %v693 = vsel %vm518, %v622, 0
    %vm695 = vcmask 1041408
    %v697 = vsel %vm695, %v32, 0
    %699 = vmatprep.subr.mxu0 0.0
    %700 = vmatpush1.msra.mxu0 0.0
    %701 = vmatprep.subr.mxu0 0.0
    %702 = vmatpush1.msra.mxu0 0.0
    %703 = vmatprep.subr.mxu0 0.0
    %704 = vmatpush1.msra.mxu0 0.0
    %705 = vmatprep.subr.mxu0 0.0
    %706 = vmatpush1.msra.mxu0 0.0
    %707 = vmatprep.subr.mxu0 0.0
    %708 = vmatpush1.msra.mxu0 0.0
    %709 = vmatprep.subr.mxu0 0.0
    %710 = vmatpush1.msra.mxu0 0.0
    %711 = vmatprep.subr.mxu0 0.0
    %712 = vmatpush1.msra.mxu0 0.0
    %713 = vmatprep.subr.mxu0 0.0
    %714 = vmatpush1.msra.mxu0 0.0
    %715 = vmatprep.subr.mxu0 0.0
    %716 = vmatpush1.msra.mxu0 0.0
    %717 = vmatprep.subr.mxu0 0.0
    %718 = vmatpush1.msra.mxu0 0.0
    %719 = vmatprep.subr.mxu0 0.0
    %720 = vmatpush1.msra.mxu0 0.0
    %721 = vmatprep.subr.mxu0 0.0
    %722 = vmatpush1.msra.mxu0 0.0
    %723 = vmatprep.subr.mxu0 0.0
    %724 = vmatpush1.msra.mxu0 0.0
    %725 = vmatprep.subr.mxu0 0.0
    %726 = vmatpush1.msra.mxu0 0.0
    %727 = vmatprep.subr.mxu0 0.0
    %728 = vmatpush1.msra.mxu0 0.0
    %729 = vmatprep.subr.mxu0 0.0
    %730 = vmatpush1.msra.mxu0 %v697
    %731 = vmatprep.subr.mxu0 0.0
    %732 = vmatpush2.msra.mxu0 0.0
    %733 = vmatprep.subr.mxu0 0.0
    %734 = vmatpush2.msra.mxu0 0.0
    %735 = vmatprep.subr.mxu0 0.0
    %736 = vmatpush2.msra.mxu0 0.0
    %737 = vmatprep.subr.mxu0 0.0
    %738 = vmatpush2.msra.mxu0 0.0
    %739 = vmatprep.subr.mxu0 0.0
    %740 = vmatpush2.msra.mxu0 0.0
    %741 = vmatprep.subr.mxu0 0.0
    %742 = vmatpush2.msra.mxu0 0.0
    %743 = vmatprep.subr.mxu0 0.0
    %744 = vmatpush2.msra.mxu0 0.0
    %745 = vmatprep.subr.mxu0 0.0
    %746 = vmatpush2.msra.mxu0 0.0
    %747 = vmatprep.subr.mxu0 0.0
    %748 = vmatpush2.msra.mxu0 0.0
    %749 = vmatprep.subr.mxu0 0.0
    %750 = vmatpush2.msra.mxu0 0.0
    %751 = vmatprep.subr.mxu0 0.0
    %752 = vmatpush2.msra.mxu0 0.0
    %753 = vmatprep.subr.mxu0 0.0
    %754 = vmatpush2.msra.mxu0 0.0
    %755 = vmatprep.subr.mxu0 0.0
    %756 = vmatpush2.msra.mxu0 0.0
    %757 = vmatprep.subr.mxu0 0.0
    %758 = vmatpush2.msra.mxu0 0.0
    %759 = vmatprep.subr.mxu0 0.0
    %760 = vmatpush2.msra.mxu0 0.0
    %761 = vmatprep.subr.mxu0 0.0
    %762 = vmatpush2.msra.mxu0 0.0
    %763 = vmatprep.mubr.f32.mxu0 0.0
    %764 = vmatmul.mubr.f32.gmra.mxu0 %v672
    %v765 = vpop.f32.mrf.mxu0
    %v766 = vadd.f32 0.0, %v765
    %v767 = vpop.f32.mrf.mxu0
    %768 = vmatprep.mubr.f32.mxu0 0.0
    %769 = vmatmul.mubr.f32.gmra.mxu0 %v675
    %v770 = vpop.f32.mrf.mxu0
    %v771 = vadd.f32 0.0, %v770
    %v772 = vpop.f32.mrf.mxu0
    %773 = vmatprep.mubr.f32.mxu0 0.0
    %774 = vmatmul.mubr.f32.gmra.mxu0 %v678
    %v775 = vpop.f32.mrf.mxu0
    %v776 = vadd.f32 0.0, %v775
    %v777 = vpop.f32.mrf.mxu0
    %778 = vmatprep.mubr.f32.mxu0 0.0
    %779 = vmatmul.mubr.f32.gmra.mxu0 %v681
    %v780 = vpop.f32.mrf.mxu0
    %v781 = vadd.f32 0.0, %v780
    %v782 = vpop.f32.mrf.mxu0
    %783 = vmatprep.mubr.f32.mxu0 0.0
    %784 = vmatmul.mubr.f32.gmra.mxu0 %v684
    %v785 = vpop.f32.mrf.mxu0
    %v786 = vadd.f32 0.0, %v785
    %v787 = vpop.f32.mrf.mxu0
    %788 = vmatprep.mubr.f32.mxu0 0.0
    %789 = vmatmul.mubr.f32.gmra.mxu0 %v687
    %v790 = vpop.f32.mrf.mxu0
    %v791 = vadd.f32 0.0, %v790
    %v792 = vpop.f32.mrf.mxu0
    %793 = vmatprep.mubr.f32.mxu0 0.0
    %794 = vmatmul.mubr.f32.gmra.mxu0 %v690
    %v795 = vpop.f32.mrf.mxu0
    %v796 = vadd.f32 0.0, %v795
    %v797 = vpop.f32.mrf.mxu0
    %798 = vmatprep.mubr.f32.mxu0 0.0
    %799 = vmatmul.mubr.f32.gmra.mxu0 %v693
    %v800 = vpop.f32.mrf.mxu0
    %v801 = vadd.f32 0.0, %v800
    %v802 = vpop.f32.mrf.mxu0
    %803 = vdwg.mxu0
    %v805 = vsel %vm518, %v663, 0
    %v808 = vsel %vm518, %v664, 0
    %v811 = vsel %vm518, %v665, 0
    %v814 = vsel %vm518, %v666, 0
    %v817 = vsel %vm518, %v667, 0
    %v820 = vsel %vm518, %v668, 0
    %v823 = vsel %vm518, %v669, 0
    %v826 = vsel %vm518, %v670, 0
    %828 = vmatprep.subr.mxu0 0.0
    %829 = vmatpush1.msra.mxu0 0.0
    %830 = vmatprep.subr.mxu0 0.0
    %831 = vmatpush1.msra.mxu0 0.0
    %832 = vmatprep.subr.mxu0 0.0
    %833 = vmatpush1.msra.mxu0 0.0
    %834 = vmatprep.subr.mxu0 0.0
    %835 = vmatpush1.msra.mxu0 0.0
    %836 = vmatprep.subr.mxu0 0.0
    %837 = vmatpush1.msra.mxu0 0.0
    %838 = vmatprep.subr.mxu0 0.0
    %839 = vmatpush1.msra.mxu0 0.0
    %840 = vmatprep.subr.mxu0 0.0
    %841 = vmatpush1.msra.mxu0 0.0
    %842 = vmatprep.subr.mxu0 0.0
    %843 = vmatpush1.msra.mxu0 0.0
    %844 = vmatprep.subr.mxu0 0.0
    %845 = vmatpush1.msra.mxu0 0.0
    %846 = vmatprep.subr.mxu0 0.0
    %847 = vmatpush1.msra.mxu0 0.0
    %848 = vmatprep.subr.mxu0 0.0
    %849 = vmatpush1.msra.mxu0 0.0
    %850 = vmatprep.subr.mxu0 0.0
    %851 = vmatpush1.msra.mxu0 0.0
    %852 = vmatprep.subr.mxu0 0.0
    %853 = vmatpush1.msra.mxu0 0.0
    %854 = vmatprep.subr.mxu0 0.0
    %855 = vmatpush1.msra.mxu0 0.0
    %856 = vmatprep.subr.mxu0 0.0
    %857 = vmatpush1.msra.mxu0 0.0
    %858 = vmatprep.subr.mxu0 0.0
    %859 = vmatpush1.msra.mxu0 %v697
    %860 = vmatprep.subr.mxu0 0.0
    %861 = vmatpush2.msra.mxu0 0.0
    %862 = vmatprep.subr.mxu0 0.0
    %863 = vmatpush2.msra.mxu0 0.0
    %864 = vmatprep.subr.mxu0 0.0
    %865 = vmatpush2.msra.mxu0 0.0
    %866 = vmatprep.subr.mxu0 0.0
    %867 = vmatpush2.msra.mxu0 0.0
    %868 = vmatprep.subr.mxu0 0.0
    %869 = vmatpush2.msra.mxu0 0.0
    %870 = vmatprep.subr.mxu0 0.0
    %871 = vmatpush2.msra.mxu0 0.0
    %872 = vmatprep.subr.mxu0 0.0
    %873 = vmatpush2.msra.mxu0 0.0
    %874 = vmatprep.subr.mxu0 0.0
    %875 = vmatpush2.msra.mxu0 0.0
    %876 = vmatprep.subr.mxu0 0.0
    %877 = vmatpush2.msra.mxu0 0.0
    %878 = vmatprep.subr.mxu0 0.0
    %879 = vmatpush2.msra.mxu0 0.0
    %880 = vmatprep.subr.mxu0 0.0
    %881 = vmatpush2.msra.mxu0 0.0
    %882 = vmatprep.subr.mxu0 0.0
    %883 = vmatpush2.msra.mxu0 0.0
    %884 = vmatprep.subr.mxu0 0.0
    %885 = vmatpush2.msra.mxu0 0.0
    %886 = vmatprep.subr.mxu0 0.0
    %887 = vmatpush2.msra.mxu0 0.0
    %888 = vmatprep.subr.mxu0 0.0
    %889 = vmatpush2.msra.mxu0 0.0
    %890 = vmatprep.subr.mxu0 0.0
    %891 = vmatpush2.msra.mxu0 0.0
    %892 = vmatprep.mubr.f32.mxu0 0.0
    %893 = vmatmul.mubr.f32.gmra.mxu0 %v805
    %v894 = vpop.f32.mrf.mxu0
    %v895 = vadd.f32 0.0, %v894
    %v896 = vpop.f32.mrf.mxu0
    %897 = vmatprep.mubr.f32.mxu0 0.0
    %898 = vmatmul.mubr.f32.gmra.mxu0 %v808
    %v899 = vpop.f32.mrf.mxu0
    %v900 = vadd.f32 0.0, %v899
    %v901 = vpop.f32.mrf.mxu0
    %902 = vmatprep.mubr.f32.mxu0 0.0
    %903 = vmatmul.mubr.f32.gmra.mxu0 %v811
    %v904 = vpop.f32.mrf.mxu0
    %v905 = vadd.f32 0.0, %v904
    %v906 = vpop.f32.mrf.mxu0
    %907 = vmatprep.mubr.f32.mxu0 0.0
    %908 = vmatmul.mubr.f32.gmra.mxu0 %v814
    %v909 = vpop.f32.mrf.mxu0
    %v910 = vadd.f32 0.0, %v909
    %v911 = vpop.f32.mrf.mxu0
    %912 = vmatprep.mubr.f32.mxu0 0.0
    %913 = vmatmul.mubr.f32.gmra.mxu0 %v817
    %v914 = vpop.f32.mrf.mxu0
    %v915 = vadd.f32 0.0, %v914
    %v916 = vpop.f32.mrf.mxu0
    %917 = vmatprep.mubr.f32.mxu0 0.0
    %918 = vmatmul.mubr.f32.gmra.mxu0 %v820
    %v919 = vpop.f32.mrf.mxu0
    %v920 = vadd.f32 0.0, %v919
    %v921 = vpop.f32.mrf.mxu0
    %922 = vmatprep.mubr.f32.mxu0 0.0
    %923 = vmatmul.mubr.f32.gmra.mxu0 %v823
    %v924 = vpop.f32.mrf.mxu0
    %v925 = vadd.f32 0.0, %v924
    %v926 = vpop.f32.mrf.mxu0
    %927 = vmatprep.mubr.f32.mxu0 0.0
    %928 = vmatmul.mubr.f32.gmra.mxu0 %v826
    %v929 = vpop.f32.mrf.mxu0
    %v930 = vadd.f32 0.0, %v929
    %v931 = vpop.f32.mrf.mxu0
    %932 = vdwg.mxu0
    %v933 = vmul.f32 %v141, %v766
    %v934 = vmul.f32 %v146, %v771
    %v935 = vmul.f32 %v151, %v776
    %v936 = vmul.f32 %v156, %v781
    %v937 = vmul.f32 %v161, %v786
    %v938 = vmul.f32 %v166, %v791
    %v939 = vmul.f32 %v171, %v796
    %v940 = vmul.f32 %v176, %v801
    %v941 = vadd.f32 %v933, %v895
    %v942 = vadd.f32 %v934, %v900
    %v943 = vadd.f32 %v935, %v905
    %v944 = vadd.f32 %v936, %v910
    %v945 = vadd.f32 %v937, %v915
    %v946 = vadd.f32 %v938, %v920
    %v947 = vadd.f32 %v939, %v925
    %v948 = vadd.f32 %v940, %v930
    %v949 = vmax.f32 %v941, 0.0
    %v950 = vmax.f32 %v942, 0.0
    %v951 = vmax.f32 %v943, 0.0
    %v952 = vmax.f32 %v944, 0.0
    %v953 = vmax.f32 %v945, 0.0
    %v954 = vmax.f32 %v946, 0.0
    %v955 = vmax.f32 %v947, 0.0
    %v956 = vmax.f32 %v948, 0.0
    %v957 = vld [vmem:[%s4] sm:$0xff]
    %v958 = vld [vmem:[%s4 + $0x8] sm:$0xff]
    %v959 = vld [vmem:[%s6] sm:$0xff]
    %v960 = vld [vmem:[%s6 + $0x8] sm:$0xff]
    %vm961 = vcmask 523264
    %v963 = vsel %vm961, %v957, 0
    %v966 = vsel %vm961, %v958, 0
    %968 = vmatprep.subr.mxu0 0.0
    %969 = vmatpush1.msra.mxu0 0.0
    %970 = vmatprep.subr.mxu0 0.0
    %971 = vmatpush1.msra.mxu0 0.0
    %972 = vmatprep.subr.mxu0 0.0
    %973 = vmatpush1.msra.mxu0 0.0
    %974 = vmatprep.subr.mxu0 0.0
    %975 = vmatpush1.msra.mxu0 0.0
    %976 = vmatprep.subr.mxu0 0.0
    %977 = vmatpush1.msra.mxu0 0.0
    %978 = vmatprep.subr.mxu0 0.0
    %979 = vmatpush1.msra.mxu0 0.0
    %980 = vmatprep.subr.mxu0 0.0
    %981 = vmatpush1.msra.mxu0 0.0
    %982 = vmatprep.subr.mxu0 0.0
    %983 = vmatpush1.msra.mxu0 0.0
    %984 = vmatprep.subr.mxu0 0.0
    %985 = vmatpush1.msra.mxu0 %v956
    %986 = vmatprep.subr.mxu0 0.0
    %987 = vmatpush1.msra.mxu0 %v955
    %988 = vmatprep.subr.mxu0 0.0
    %989 = vmatpush1.msra.mxu0 %v954
    %990 = vmatprep.subr.mxu0 0.0
    %991 = vmatpush1.msra.mxu0 %v953
    %992 = vmatprep.subr.mxu0 0.0
    %993 = vmatpush1.msra.mxu0 %v952
    %994 = vmatprep.subr.mxu0 0.0
    %995 = vmatpush1.msra.mxu0 %v951
    %996 = vmatprep.subr.mxu0 0.0
    %997 = vmatpush1.msra.mxu0 %v950
    %998 = vmatprep.subr.mxu0 0.0
    %999 = vmatpush1.msra.mxu0 %v949
    %1000 = vmatprep.subr.mxu0 0.0
    %1001 = vmatpush2.msra.mxu0 0.0
    %1002 = vmatprep.subr.mxu0 0.0
    %1003 = vmatpush2.msra.mxu0 0.0
    %1004 = vmatprep.subr.mxu0 0.0
    %1005 = vmatpush2.msra.mxu0 0.0
    %1006 = vmatprep.subr.mxu0 0.0
    %1007 = vmatpush2.msra.mxu0 0.0
    %1008 = vmatprep.subr.mxu0 0.0
    %1009 = vmatpush2.msra.mxu0 0.0
    %1010 = vmatprep.subr.mxu0 0.0
    %1011 = vmatpush2.msra.mxu0 0.0
    %1012 = vmatprep.subr.mxu0 0.0
    %1013 = vmatpush2.msra.mxu0 0.0
    %1014 = vmatprep.subr.mxu0 0.0
    %1015 = vmatpush2.msra.mxu0 0.0
    %1016 = vmatprep.subr.mxu0 0.0
    %1017 = vmatpush2.msra.mxu0 0.0
    %1018 = vmatprep.subr.mxu0 0.0
    %1019 = vmatpush2.msra.mxu0 0.0
    %1020 = vmatprep.subr.mxu0 0.0
    %1021 = vmatpush2.msra.mxu0 0.0
    %1022 = vmatprep.subr.mxu0 0.0
    %1023 = vmatpush2.msra.mxu0 0.0
    %1024 = vmatprep.subr.mxu0 0.0
    %1025 = vmatpush2.msra.mxu0 0.0
    %1026 = vmatprep.subr.mxu0 0.0
    %1027 = vmatpush2.msra.mxu0 0.0
    %1028 = vmatprep.subr.mxu0 0.0
    %1029 = vmatpush2.msra.mxu0 0.0
    %1030 = vmatprep.subr.mxu0 0.0
    %1031 = vmatpush2.msra.mxu0 0.0
    %1032 = vmatprep.mubr.f32.mxu0 0.0
    %1033 = vmatmul.mubr.f32.gmra.mxu0 %v963
    %v1034 = vpop.f32.mrf.mxu0
    %v1035 = vadd.f32 0.0, %v1034
    %v1036 = vpop.f32.mrf.mxu0
    %1037 = vmatprep.mubr.f32.mxu0 0.0
    %1038 = vmatmul.mubr.f32.gmra.mxu0 %v966
    %v1039 = vpop.f32.mrf.mxu0
    %v1040 = vadd.f32 0.0, %v1039
    %v1041 = vpop.f32.mrf.mxu0
    %1042 = vdwg.mxu0
    %v1044 = vsel %vm179, %v1035, 0
    %v1047 = vsel %vm179, %v1040, 0
    %1049 = vmatprep.subr.mxu0 0.0
    %1050 = vmatpush1.msra.mxu0 0.0
    %1051 = vmatprep.subr.mxu0 0.0
    %1052 = vmatpush1.msra.mxu0 0.0
    %1053 = vmatprep.subr.mxu0 0.0
    %1054 = vmatpush1.msra.mxu0 0.0
    %1055 = vmatprep.subr.mxu0 0.0
    %1056 = vmatpush1.msra.mxu0 0.0
    %1057 = vmatprep.subr.mxu0 0.0
    %1058 = vmatpush1.msra.mxu0 0.0
    %1059 = vmatprep.subr.mxu0 0.0
    %1060 = vmatpush1.msra.mxu0 0.0
    %1061 = vmatprep.subr.mxu0 0.0
    %1062 = vmatpush1.msra.mxu0 0.0
    %1063 = vmatprep.subr.mxu0 0.0
    %1064 = vmatpush1.msra.mxu0 0.0
    %1065 = vmatprep.subr.mxu0 0.0
    %1066 = vmatpush1.msra.mxu0 0.0
    %1067 = vmatprep.subr.mxu0 0.0
    %1068 = vmatpush1.msra.mxu0 0.0
    %1069 = vmatprep.subr.mxu0 0.0
    %1070 = vmatpush1.msra.mxu0 0.0
    %1071 = vmatprep.subr.mxu0 0.0
    %1072 = vmatpush1.msra.mxu0 0.0
    %1073 = vmatprep.subr.mxu0 0.0
    %1074 = vmatpush1.msra.mxu0 %v31
    %1075 = vmatprep.subr.mxu0 0.0
    %1076 = vmatpush1.msra.mxu0 %v30
    %1077 = vmatprep.subr.mxu0 0.0
    %1078 = vmatpush1.msra.mxu0 %v29
    %1079 = vmatprep.subr.mxu0 0.0
    %1080 = vmatpush1.msra.mxu0 %v28
    %1081 = vmatprep.subr.mxu0 0.0
    %1082 = vmatpush2.msra.mxu0 0.0
    %1083 = vmatprep.subr.mxu0 0.0
    %1084 = vmatpush2.msra.mxu0 0.0
    %1085 = vmatprep.subr.mxu0 0.0
    %1086 = vmatpush2.msra.mxu0 0.0
    %1087 = vmatprep.subr.mxu0 0.0
    %1088 = vmatpush2.msra.mxu0 0.0
    %1089 = vmatprep.subr.mxu0 0.0
    %1090 = vmatpush2.msra.mxu0 0.0
    %1091 = vmatprep.subr.mxu0 0.0
    %1092 = vmatpush2.msra.mxu0 0.0
    %1093 = vmatprep.subr.mxu0 0.0
    %1094 = vmatpush2.msra.mxu0 0.0
    %1095 = vmatprep.subr.mxu0 0.0
    %1096 = vmatpush2.msra.mxu0 0.0
    %1097 = vmatprep.subr.mxu0 0.0
    %1098 = vmatpush2.msra.mxu0 0.0
    %1099 = vmatprep.subr.mxu0 0.0
    %1100 = vmatpush2.msra.mxu0 0.0
    %1101 = vmatprep.subr.mxu0 0.0
    %1102 = vmatpush2.msra.mxu0 0.0
    %1103 = vmatprep.subr.mxu0 0.0
    %1104 = vmatpush2.msra.mxu0 0.0
    %1105 = vmatprep.subr.mxu0 0.0
    %1106 = vmatpush2.msra.mxu0 0.0
    %1107 = vmatprep.subr.mxu0 0.0
    %1108 = vmatpush2.msra.mxu0 0.0
    %1109 = vmatprep.subr.mxu0 0.0
    %1110 = vmatpush2.msra.mxu0 0.0
    %1111 = vmatprep.subr.mxu0 0.0
    %1112 = vmatpush2.msra.mxu0 0.0
    %1113 = vmatprep.mubr.f32.mxu0 0.0
    %1114 = vmatmul.mubr.f32.gmra.mxu0 %v1044
    %v1115 = vpop.f32.mrf.mxu0
    %v1116 = vadd.f32 0.0, %v1115
    %v1117 = vpop.f32.mrf.mxu0
    %1118 = vmatprep.mubr.f32.mxu0 0.0
    %1119 = vmatmul.mubr.f32.gmra.mxu0 %v1047
    %v1120 = vpop.f32.mrf.mxu0
    %v1121 = vadd.f32 0.0, %v1120
    %v1122 = vpop.f32.mrf.mxu0
    %1123 = vdwg.mxu0
    %v1124 = vmul.f32 %v1035, %v1035
    %v1125 = vmul.f32 %v1040, %v1040
    %v1127 = vsel %vm179, %v1124, 0
    %v1130 = vsel %vm179, %v1125, 0
    %1132 = vmatprep.subr.mxu0 0.0
    %1133 = vmatpush1.msra.mxu0 0.0
    %1134 = vmatprep.subr.mxu0 0.0
    %1135 = vmatpush1.msra.mxu0 0.0
    %1136 = vmatprep.subr.mxu0 0.0
    %1137 = vmatpush1.msra.mxu0 0.0
    %1138 = vmatprep.subr.mxu0 0.0
    %1139 = vmatpush1.msra.mxu0 0.0
    %1140 = vmatprep.subr.mxu0 0.0
    %1141 = vmatpush1.msra.mxu0 0.0
    %1142 = vmatprep.subr.mxu0 0.0
    %1143 = vmatpush1.msra.mxu0 0.0
    %1144 = vmatprep.subr.mxu0 0.0
    %1145 = vmatpush1.msra.mxu0 0.0
    %1146 = vmatprep.subr.mxu0 0.0
    %1147 = vmatpush1.msra.mxu0 0.0
    %1148 = vmatprep.subr.mxu0 0.0
    %1149 = vmatpush1.msra.mxu0 0.0
    %1150 = vmatprep.subr.mxu0 0.0
    %1151 = vmatpush1.msra.mxu0 0.0
    %1152 = vmatprep.subr.mxu0 0.0
    %1153 = vmatpush1.msra.mxu0 0.0
    %1154 = vmatprep.subr.mxu0 0.0
    %1155 = vmatpush1.msra.mxu0 0.0
    %1156 = vmatprep.subr.mxu0 0.0
    %1157 = vmatpush1.msra.mxu0 %v31
    %1158 = vmatprep.subr.mxu0 0.0
    %1159 = vmatpush1.msra.mxu0 %v30
    %1160 = vmatprep.subr.mxu0 0.0
    %1161 = vmatpush1.msra.mxu0 %v29
    %1162 = vmatprep.subr.mxu0 0.0
    %1163 = vmatpush1.msra.mxu0 %v28
    %1164 = vmatprep.subr.mxu0 0.0
    %1165 = vmatpush2.msra.mxu0 0.0
    %1166 = vmatprep.subr.mxu0 0.0
    %1167 = vmatpush2.msra.mxu0 0.0
    %1168 = vmatprep.subr.mxu0 0.0
    %1169 = vmatpush2.msra.mxu0 0.0
    %1170 = vmatprep.subr.mxu0 0.0
    %1171 = vmatpush2.msra.mxu0 0.0
    %1172 = vmatprep.subr.mxu0 0.0
    %1173 = vmatpush2.msra.mxu0 0.0
    %1174 = vmatprep.subr.mxu0 0.0
    %1175 = vmatpush2.msra.mxu0 0.0
    %1176 = vmatprep.subr.mxu0 0.0
    %1177 = vmatpush2.msra.mxu0 0.0
    %1178 = vmatprep.subr.mxu0 0.0
    %1179 = vmatpush2.msra.mxu0 0.0
    %1180 = vmatprep.subr.mxu0 0.0
    %1181 = vmatpush2.msra.mxu0 0.0
    %1182 = vmatprep.subr.mxu0 0.0
    %1183 = vmatpush2.msra.mxu0 0.0
    %1184 = vmatprep.subr.mxu0 0.0
    %1185 = vmatpush2.msra.mxu0 0.0
    %1186 = vmatprep.subr.mxu0 0.0
    %1187 = vmatpush2.msra.mxu0 0.0
    %1188 = vmatprep.subr.mxu0 0.0
    %1189 = vmatpush2.msra.mxu0 0.0
    %1190 = vmatprep.subr.mxu0 0.0
    %1191 = vmatpush2.msra.mxu0 0.0
    %1192 = vmatprep.subr.mxu0 0.0
    %1193 = vmatpush2.msra.mxu0 0.0
    %1194 = vmatprep.subr.mxu0 0.0
    %1195 = vmatpush2.msra.mxu0 0.0
    %1196 = vmatprep.mubr.f32.mxu0 0.0
    %1197 = vmatmul.mubr.f32.gmra.mxu0 %v1127
    %v1198 = vpop.f32.mrf.mxu0
    %v1199 = vadd.f32 0.0, %v1198
    %v1200 = vpop.f32.mrf.mxu0
    %1201 = vmatprep.mubr.f32.mxu0 0.0
    %1202 = vmatmul.mubr.f32.gmra.mxu0 %v1130
    %v1203 = vpop.f32.mrf.mxu0
    %v1204 = vadd.f32 0.0, %v1203
    %v1205 = vpop.f32.mrf.mxu0
    %1206 = vdwg.mxu0
    %v1207 = vmul.f32 %v1116, 0.0625
    %v1208 = vmul.f32 %v1121, 0.0625
    %v1209 = vmul.f32 %v1199, 0.0625
    %v1210 = vmul.f32 %v1204, 0.0625
    %v1211 = vmul.f32 %v1207, %v1207
    %v1212 = vmul.f32 %v1208, %v1208
    %v1213 = vsub.f32 %v1209, %v1211
    %v1214 = vsub.f32 %v1210, %v1212
    %v1215 = vmax.f32 %v1213, 0.0
    %v1216 = vmax.f32 %v1214, 0.0
    %v1217 = vadd.f32 %v1215, 0.001
    %v1218 = vadd.f32 %v1216, 0.001
    %v1219 = vrsqrt.pop %v1217
    %v1220 = vrsqrt.pop %v1218
    %v1221 = vmul.f32 %v1215, %v1219
    %v1222 = vmul.f32 %v1216, %v1220
    %v1223 = vmul.f32 %v1221, %v1219
    %v1224 = vmul.f32 %v1222, %v1220
    %v1225 = vsel %vm518, %v1223, 0.0
    %1226 = vadd.xlane.f32.xlu0 %v1225
    %v1227 = vpop.xlane.xlu0 %1226
    %v1228 = vsel %vm518, %v1224, 0.0
    %1229 = vadd.xlane.f32.xlu0 %v1228
    %v1230 = vpop.xlane.xlu0 %1229
    %v1231 = vmul.f32 %v1227, 0.5
    %v1232 = vmul.f32 %v1230, 0.5
    %v1233 = vadd.f32 %v1231, 1e-05
    %v1234 = vadd.f32 %v1232, 1e-05
    %v1235 = vrsqrt.pop %v1233
    %v1236 = vrsqrt.pop %v1234
    %1238 = vset.pattern.permute.xlu0 2
    %1239 = vperm.xlu0 %1238, %v959
    %v1240 = vpop.permute.xlu0 %1239
    %1243 = vset.pattern.permute.xlu0 2
    %1244 = vperm.xlu0 %1243, %v960
    %v1245 = vpop.permute.xlu0 %1244
    %v1247 = vmul.f32 %v1240, %v1219
    %v1248 = vmul.f32 %v1245, %v1220
    %v1249 = vmul.f32 %v1247, %v1235
    %v1250 = vmul.f32 %v1248, %v1236
    %v1251 = vmul.f32 %v1207, %v1249
    %v1252 = vmul.f32 %v1208, %v1250
    %1253 = vset.pattern.permute.xlu0 3
    %1254 = vperm.xlu0 %1253, %v959
    %v1255 = vpop.permute.xlu0 %1254
    %1257 = vset.pattern.permute.xlu0 3
    %1258 = vperm.xlu0 %1257, %v960
    %v1259 = vpop.permute.xlu0 %1258
    %v1261 = vsub.f32 %v1255, %v1251
    %v1262 = vsub.f32 %v1259, %v1252
    %v1264 = vsel %vm518, %v1249, 0
    %v1267 = vsel %vm518, %v1250, 0
    %1269 = vmatprep.subr.mxu0 0.0
    %1270 = vmatpush1.msra.mxu0 0.0
    %1271 = vmatprep.subr.mxu0 0.0
    %1272 = vmatpush1.msra.mxu0 0.0
    %1273 = vmatprep.subr.mxu0 0.0
    %1274 = vmatpush1.msra.mxu0 0.0
    %1275 = vmatprep.subr.mxu0 0.0
    %1276 = vmatpush1.msra.mxu0 0.0
    %1277 = vmatprep.subr.mxu0 0.0
    %1278 = vmatpush1.msra.mxu0 0.0
    %1279 = vmatprep.subr.mxu0 0.0
    %1280 = vmatpush1.msra.mxu0 0.0
    %1281 = vmatprep.subr.mxu0 0.0
    %1282 = vmatpush1.msra.mxu0 0.0
    %1283 = vmatprep.subr.mxu0 0.0
    %1284 = vmatpush1.msra.mxu0 0.0
    %1285 = vmatprep.subr.mxu0 0.0
    %1286 = vmatpush1.msra.mxu0 0.0
    %1287 = vmatprep.subr.mxu0 0.0
    %1288 = vmatpush1.msra.mxu0 0.0
    %1289 = vmatprep.subr.mxu0 0.0
    %1290 = vmatpush1.msra.mxu0 0.0
    %1291 = vmatprep.subr.mxu0 0.0
    %1292 = vmatpush1.msra.mxu0 0.0
    %1293 = vmatprep.subr.mxu0 0.0
    %1294 = vmatpush1.msra.mxu0 0.0
    %1295 = vmatprep.subr.mxu0 0.0
    %1296 = vmatpush1.msra.mxu0 0.0
    %1297 = vmatprep.subr.mxu0 0.0
    %1298 = vmatpush1.msra.mxu0 0.0
    %1299 = vmatprep.subr.mxu0 0.0
    %1300 = vmatpush1.msra.mxu0 %v697
    %1301 = vmatprep.subr.mxu0 0.0
    %1302 = vmatpush2.msra.mxu0 0.0
    %1303 = vmatprep.subr.mxu0 0.0
    %1304 = vmatpush2.msra.mxu0 0.0
    %1305 = vmatprep.subr.mxu0 0.0
    %1306 = vmatpush2.msra.mxu0 0.0
    %1307 = vmatprep.subr.mxu0 0.0
    %1308 = vmatpush2.msra.mxu0 0.0
    %1309 = vmatprep.subr.mxu0 0.0
    %1310 = vmatpush2.msra.mxu0 0.0
    %1311 = vmatprep.subr.mxu0 0.0
    %1312 = vmatpush2.msra.mxu0 0.0
    %1313 = vmatprep.subr.mxu0 0.0
    %1314 = vmatpush2.msra.mxu0 0.0
    %1315 = vmatprep.subr.mxu0 0.0
    %1316 = vmatpush2.msra.mxu0 0.0
    %1317 = vmatprep.subr.mxu0 0.0
    %1318 = vmatpush2.msra.mxu0 0.0
    %1319 = vmatprep.subr.mxu0 0.0
    %1320 = vmatpush2.msra.mxu0 0.0
    %1321 = vmatprep.subr.mxu0 0.0
    %1322 = vmatpush2.msra.mxu0 0.0
    %1323 = vmatprep.subr.mxu0 0.0
    %1324 = vmatpush2.msra.mxu0 0.0
    %1325 = vmatprep.subr.mxu0 0.0
    %1326 = vmatpush2.msra.mxu0 0.0
    %1327 = vmatprep.subr.mxu0 0.0
    %1328 = vmatpush2.msra.mxu0 0.0
    %1329 = vmatprep.subr.mxu0 0.0
    %1330 = vmatpush2.msra.mxu0 0.0
    %1331 = vmatprep.subr.mxu0 0.0
    %1332 = vmatpush2.msra.mxu0 0.0
    %1333 = vmatprep.mubr.f32.mxu0 0.0
    %1334 = vmatmul.mubr.f32.gmra.mxu0 %v1264
    %v1335 = vpop.f32.mrf.mxu0
    %v1336 = vadd.f32 0.0, %v1335
    %v1337 = vpop.f32.mrf.mxu0
    %1338 = vmatprep.mubr.f32.mxu0 0.0
    %1339 = vmatmul.mubr.f32.gmra.mxu0 %v1267
    %v1340 = vpop.f32.mrf.mxu0
    %v1341 = vadd.f32 0.0, %v1340
    %v1342 = vpop.f32.mrf.mxu0
    %1343 = vdwg.mxu0
    %v1345 = vsel %vm518, %v1261, 0
    %v1348 = vsel %vm518, %v1262, 0
    %1350 = vmatprep.subr.mxu0 0.0
    %1351 = vmatpush1.msra.mxu0 0.0
    %1352 = vmatprep.subr.mxu0 0.0
    %1353 = vmatpush1.msra.mxu0 0.0
    %1354 = vmatprep.subr.mxu0 0.0
    %1355 = vmatpush1.msra.mxu0 0.0
    %1356 = vmatprep.subr.mxu0 0.0
    %1357 = vmatpush1.msra.mxu0 0.0
    %1358 = vmatprep.subr.mxu0 0.0
    %1359 = vmatpush1.msra.mxu0 0.0
    %1360 = vmatprep.subr.mxu0 0.0
    %1361 = vmatpush1.msra.mxu0 0.0
    %1362 = vmatprep.subr.mxu0 0.0
    %1363 = vmatpush1.msra.mxu0 0.0
    %1364 = vmatprep.subr.mxu0 0.0
    %1365 = vmatpush1.msra.mxu0 0.0
    %1366 = vmatprep.subr.mxu0 0.0
    %1367 = vmatpush1.msra.mxu0 0.0
    %1368 = vmatprep.subr.mxu0 0.0
    %1369 = vmatpush1.msra.mxu0 0.0
    %1370 = vmatprep.subr.mxu0 0.0
    %1371 = vmatpush1.msra.mxu0 0.0
    %1372 = vmatprep.subr.mxu0 0.0
    %1373 = vmatpush1.msra.mxu0 0.0
    %1374 = vmatprep.subr.mxu0 0.0
    %1375 = vmatpush1.msra.mxu0 0.0
    %1376 = vmatprep.subr.mxu0 0.0
    %1377 = vmatpush1.msra.mxu0 0.0
    %1378 = vmatprep.subr.mxu0 0.0
    %1379 = vmatpush1.msra.mxu0 0.0
    %1380 = vmatprep.subr.mxu0 0.0
    %1381 = vmatpush1.msra.mxu0 %v697
    %1382 = vmatprep.subr.mxu0 0.0
    %1383 = vmatpush2.msra.mxu0 0.0
    %1384 = vmatprep.subr.mxu0 0.0
    %1385 = vmatpush2.msra.mxu0 0.0
    %1386 = vmatprep.subr.mxu0 0.0
    %1387 = vmatpush2.msra.mxu0 0.0
    %1388 = vmatprep.subr.mxu0 0.0
    %1389 = vmatpush2.msra.mxu0 0.0
    %1390 = vmatprep.subr.mxu0 0.0
    %1391 = vmatpush2.msra.mxu0 0.0
    %1392 = vmatprep.subr.mxu0 0.0
    %1393 = vmatpush2.msra.mxu0 0.0
    %1394 = vmatprep.subr.mxu0 0.0
    %1395 = vmatpush2.msra.mxu0 0.0
    %1396 = vmatprep.subr.mxu0 0.0
    %1397 = vmatpush2.msra.mxu0 0.0
    %1398 = vmatprep.subr.mxu0 0.0
    %1399 = vmatpush2.msra.mxu0 0.0
    %1400 = vmatprep.subr.mxu0 0.0
    %1401 = vmatpush2.msra.mxu0 0.0
    %1402 = vmatprep.subr.mxu0 0.0
    %1403 = vmatpush2.msra.mxu0 0.0
    %1404 = vmatprep.subr.mxu0 0.0
    %1405 = vmatpush2.msra.mxu0 0.0
    %1406 = vmatprep.subr.mxu0 0.0
    %1407 = vmatpush2.msra.mxu0 0.0
    %1408 = vmatprep.subr.mxu0 0.0
    %1409 = vmatpush2.msra.mxu0 0.0
    %1410 = vmatprep.subr.mxu0 0.0
    %1411 = vmatpush2.msra.mxu0 0.0
    %1412 = vmatprep.subr.mxu0 0.0
    %1413 = vmatpush2.msra.mxu0 0.0
    %1414 = vmatprep.mubr.f32.mxu0 0.0
    %1415 = vmatmul.mubr.f32.gmra.mxu0 %v1345
    %v1416 = vpop.f32.mrf.mxu0
    %v1417 = vadd.f32 0.0, %v1416
    %v1418 = vpop.f32.mrf.mxu0
    %1419 = vmatprep.mubr.f32.mxu0 0.0
    %1420 = vmatmul.mubr.f32.gmra.mxu0 %v1348
    %v1421 = vpop.f32.mrf.mxu0
    %v1422 = vadd.f32 0.0, %v1421
    %v1423 = vpop.f32.mrf.mxu0
    %1424 = vdwg.mxu0
    %v1425 = vmul.f32 %v1035, %v1336
    %v1426 = vmul.f32 %v1040, %v1341
    %v1427 = vadd.f32 %v1425, %v1417
    %v1428 = vadd.f32 %v1426, %v1422
    %v1429 = vmax.f32 %v1427, 0.0
    %v1430 = vmax.f32 %v1428, 0.0
    %v1431 = vld [vmem:[%s5] sm:$0xf]
    %v1432 = vld [vmem:[%s6] sm:$0xf]
    %vm1433 = vcmask 130048
    %v1435 = vsel %vm1433, %v1431, 0
    %1437 = vmatprep.subr.mxu0 0.0
    %1438 = vmatpush1.msra.mxu0 0.0
    %1439 = vmatprep.subr.mxu0 0.0
    %1440 = vmatpush1.msra.mxu0 0.0
    %1441 = vmatprep.subr.mxu0 0.0
    %1442 = vmatpush1.msra.mxu0 0.0
    %1443 = vmatprep.subr.mxu0 0.0
    %1444 = vmatpush1.msra.mxu0 0.0
    %1445 = vmatprep.subr.mxu0 0.0
    %1446 = vmatpush1.msra.mxu0 0.0
    %1447 = vmatprep.subr.mxu0 0.0
    %1448 = vmatpush1.msra.mxu0 0.0
    %1449 = vmatprep.subr.mxu0 0.0
    %1450 = vmatpush1.msra.mxu0 0.0
    %1451 = vmatprep.subr.mxu0 0.0
    %1452 = vmatpush1.msra.mxu0 0.0
    %1453 = vmatprep.subr.mxu0 0.0
    %1454 = vmatpush1.msra.mxu0 0.0
    %1455 = vmatprep.subr.mxu0 0.0
    %1456 = vmatpush1.msra.mxu0 0.0
    %1457 = vmatprep.subr.mxu0 0.0
    %1458 = vmatpush1.msra.mxu0 0.0
    %1459 = vmatprep.subr.mxu0 0.0
    %1460 = vmatpush1.msra.mxu0 0.0
    %1461 = vmatprep.subr.mxu0 0.0
    %1462 = vmatpush1.msra.mxu0 0.0
    %1463 = vmatprep.subr.mxu0 0.0
    %1464 = vmatpush1.msra.mxu0 0.0
    %1465 = vmatprep.subr.mxu0 0.0
    %1466 = vmatpush1.msra.mxu0 %v1430
    %1467 = vmatprep.subr.mxu0 0.0
    %1468 = vmatpush1.msra.mxu0 %v1429
    %1469 = vmatprep.subr.mxu0 0.0
    %1470 = vmatpush2.msra.mxu0 0.0
    %1471 = vmatprep.subr.mxu0 0.0
    %1472 = vmatpush2.msra.mxu0 0.0
    %1473 = vmatprep.subr.mxu0 0.0
    %1474 = vmatpush2.msra.mxu0 0.0
    %1475 = vmatprep.subr.mxu0 0.0
    %1476 = vmatpush2.msra.mxu0 0.0
    %1477 = vmatprep.subr.mxu0 0.0
    %1478 = vmatpush2.msra.mxu0 0.0
    %1479 = vmatprep.subr.mxu0 0.0
    %1480 = vmatpush2.msra.mxu0 0.0
    %1481 = vmatprep.subr.mxu0 0.0
    %1482 = vmatpush2.msra.mxu0 0.0
    %1483 = vmatprep.subr.mxu0 0.0
    %1484 = vmatpush2.msra.mxu0 0.0
    %1485 = vmatprep.subr.mxu0 0.0
    %1486 = vmatpush2.msra.mxu0 0.0
    %1487 = vmatprep.subr.mxu0 0.0
    %1488 = vmatpush2.msra.mxu0 0.0
    %1489 = vmatprep.subr.mxu0 0.0
    %1490 = vmatpush2.msra.mxu0 0.0
    %1491 = vmatprep.subr.mxu0 0.0
    %1492 = vmatpush2.msra.mxu0 0.0
    %1493 = vmatprep.subr.mxu0 0.0
    %1494 = vmatpush2.msra.mxu0 0.0
    %1495 = vmatprep.subr.mxu0 0.0
    %1496 = vmatpush2.msra.mxu0 0.0
    %1497 = vmatprep.subr.mxu0 0.0
    %1498 = vmatpush2.msra.mxu0 0.0
    %1499 = vmatprep.subr.mxu0 0.0
    %1500 = vmatpush2.msra.mxu0 0.0
    %1501 = vmatprep.mubr.f32.mxu0 0.0
    %1502 = vmatmul.mubr.f32.gmra.mxu0 %v1435
    %v1503 = vpop.f32.mrf.mxu0
    %v1504 = vadd.f32 0.0, %v1503
    %v1505 = vpop.f32.mrf.mxu0
    %1506 = vdwg.mxu0
    %v1508 = vsel %vm179, %v1504, 0
    %1510 = vmatprep.subr.mxu0 0.0
    %1511 = vmatpush1.msra.mxu0 0.0
    %1512 = vmatprep.subr.mxu0 0.0
    %1513 = vmatpush1.msra.mxu0 0.0
    %1514 = vmatprep.subr.mxu0 0.0
    %1515 = vmatpush1.msra.mxu0 0.0
    %1516 = vmatprep.subr.mxu0 0.0
    %1517 = vmatpush1.msra.mxu0 0.0
    %1518 = vmatprep.subr.mxu0 0.0
    %1519 = vmatpush1.msra.mxu0 0.0
    %1520 = vmatprep.subr.mxu0 0.0
    %1521 = vmatpush1.msra.mxu0 0.0
    %1522 = vmatprep.subr.mxu0 0.0
    %1523 = vmatpush1.msra.mxu0 0.0
    %1524 = vmatprep.subr.mxu0 0.0
    %1525 = vmatpush1.msra.mxu0 0.0
    %1526 = vmatprep.subr.mxu0 0.0
    %1527 = vmatpush1.msra.mxu0 0.0
    %1528 = vmatprep.subr.mxu0 0.0
    %1529 = vmatpush1.msra.mxu0 0.0
    %1530 = vmatprep.subr.mxu0 0.0
    %1531 = vmatpush1.msra.mxu0 0.0
    %1532 = vmatprep.subr.mxu0 0.0
    %1533 = vmatpush1.msra.mxu0 0.0
    %1534 = vmatprep.subr.mxu0 0.0
    %1535 = vmatpush1.msra.mxu0 %v31
    %1536 = vmatprep.subr.mxu0 0.0
    %1537 = vmatpush1.msra.mxu0 %v30
    %1538 = vmatprep.subr.mxu0 0.0
    %1539 = vmatpush1.msra.mxu0 %v29
    %1540 = vmatprep.subr.mxu0 0.0
    %1541 = vmatpush1.msra.mxu0 %v28
    %1542 = vmatprep.subr.mxu0 0.0
    %1543 = vmatpush2.msra.mxu0 0.0
    %1544 = vmatprep.subr.mxu0 0.0
    %1545 = vmatpush2.msra.mxu0 0.0
    %1546 = vmatprep.subr.mxu0 0.0
    %1547 = vmatpush2.msra.mxu0 0.0
    %1548 = vmatprep.subr.mxu0 0.0
    %1549 = vmatpush2.msra.mxu0 0.0
    %1550 = vmatprep.subr.mxu0 0.0
    %1551 = vmatpush2.msra.mxu0 0.0
    %1552 = vmatprep.subr.mxu0 0.0
    %1553 = vmatpush2.msra.mxu0 0.0
    %1554 = vmatprep.subr.mxu0 0.0
    %1555 = vmatpush2.msra.mxu0 0.0
    %1556 = vmatprep.subr.mxu0 0.0
    %1557 = vmatpush2.msra.mxu0 0.0
    %1558 = vmatprep.subr.mxu0 0.0
    %1559 = vmatpush2.msra.mxu0 0.0
    %1560 = vmatprep.subr.mxu0 0.0
    %1561 = vmatpush2.msra.mxu0 0.0
    %1562 = vmatprep.subr.mxu0 0.0
    %1563 = vmatpush2.msra.mxu0 0.0
    %1564 = vmatprep.subr.mxu0 0.0
    %1565 = vmatpush2.msra.mxu0 0.0
    %1566 = vmatprep.subr.mxu0 0.0
    %1567 = vmatpush2.msra.mxu0 0.0
    %1568 = vmatprep.subr.mxu0 0.0
    %1569 = vmatpush2.msra.mxu0 0.0
    %1570 = vmatprep.subr.mxu0 0.0
    %1571 = vmatpush2.msra.mxu0 0.0
    %1572 = vmatprep.subr.mxu0 0.0
    %1573 = vmatpush2.msra.mxu0 0.0
    %1574 = vmatprep.mubr.f32.mxu0 0.0
    %1575 = vmatmul.mubr.f32.gmra.mxu0 %v1508
    %v1576 = vpop.f32.mrf.mxu0
    %v1577 = vadd.f32 0.0, %v1576
    %v1578 = vpop.f32.mrf.mxu0
    %1579 = vdwg.mxu0
    %v1580 = vmul.f32 %v1504, %v1504
    %v1582 = vsel %vm179, %v1580, 0
    %1584 = vmatprep.subr.mxu0 0.0
    %1585 = vmatpush1.msra.mxu0 0.0
    %1586 = vmatprep.subr.mxu0 0.0
    %1587 = vmatpush1.msra.mxu0 0.0
    %1588 = vmatprep.subr.mxu0 0.0
    %1589 = vmatpush1.msra.mxu0 0.0
    %1590 = vmatprep.subr.mxu0 0.0
    %1591 = vmatpush1.msra.mxu0 0.0
    %1592 = vmatprep.subr.mxu0 0.0
    %1593 = vmatpush1.msra.mxu0 0.0
    %1594 = vmatprep.subr.mxu0 0.0
    %1595 = vmatpush1.msra.mxu0 0.0
    %1596 = vmatprep.subr.mxu0 0.0
    %1597 = vmatpush1.msra.mxu0 0.0
    %1598 = vmatprep.subr.mxu0 0.0
    %1599 = vmatpush1.msra.mxu0 0.0
    %1600 = vmatprep.subr.mxu0 0.0
    %1601 = vmatpush1.msra.mxu0 0.0
    %1602 = vmatprep.subr.mxu0 0.0
    %1603 = vmatpush1.msra.mxu0 0.0
    %1604 = vmatprep.subr.mxu0 0.0
    %1605 = vmatpush1.msra.mxu0 0.0
    %1606 = vmatprep.subr.mxu0 0.0
    %1607 = vmatpush1.msra.mxu0 0.0
    %1608 = vmatprep.subr.mxu0 0.0
    %1609 = vmatpush1.msra.mxu0 %v31
    %1610 = vmatprep.subr.mxu0 0.0
    %1611 = vmatpush1.msra.mxu0 %v30
    %1612 = vmatprep.subr.mxu0 0.0
    %1613 = vmatpush1.msra.mxu0 %v29
    %1614 = vmatprep.subr.mxu0 0.0
    %1615 = vmatpush1.msra.mxu0 %v28
    %1616 = vmatprep.subr.mxu0 0.0
    %1617 = vmatpush2.msra.mxu0 0.0
    %1618 = vmatprep.subr.mxu0 0.0
    %1619 = vmatpush2.msra.mxu0 0.0
    %1620 = vmatprep.subr.mxu0 0.0
    %1621 = vmatpush2.msra.mxu0 0.0
    %1622 = vmatprep.subr.mxu0 0.0
    %1623 = vmatpush2.msra.mxu0 0.0
    %1624 = vmatprep.subr.mxu0 0.0
    %1625 = vmatpush2.msra.mxu0 0.0
    %1626 = vmatprep.subr.mxu0 0.0
    %1627 = vmatpush2.msra.mxu0 0.0
    %1628 = vmatprep.subr.mxu0 0.0
    %1629 = vmatpush2.msra.mxu0 0.0
    %1630 = vmatprep.subr.mxu0 0.0
    %1631 = vmatpush2.msra.mxu0 0.0
    %1632 = vmatprep.subr.mxu0 0.0
    %1633 = vmatpush2.msra.mxu0 0.0
    %1634 = vmatprep.subr.mxu0 0.0
    %1635 = vmatpush2.msra.mxu0 0.0
    %1636 = vmatprep.subr.mxu0 0.0
    %1637 = vmatpush2.msra.mxu0 0.0
    %1638 = vmatprep.subr.mxu0 0.0
    %1639 = vmatpush2.msra.mxu0 0.0
    %1640 = vmatprep.subr.mxu0 0.0
    %1641 = vmatpush2.msra.mxu0 0.0
    %1642 = vmatprep.subr.mxu0 0.0
    %1643 = vmatpush2.msra.mxu0 0.0
    %1644 = vmatprep.subr.mxu0 0.0
    %1645 = vmatpush2.msra.mxu0 0.0
    %1646 = vmatprep.subr.mxu0 0.0
    %1647 = vmatpush2.msra.mxu0 0.0
    %1648 = vmatprep.mubr.f32.mxu0 0.0
    %1649 = vmatmul.mubr.f32.gmra.mxu0 %v1582
    %v1650 = vpop.f32.mrf.mxu0
    %v1651 = vadd.f32 0.0, %v1650
    %v1652 = vpop.f32.mrf.mxu0
    %1653 = vdwg.mxu0
    %v1654 = vmul.f32 %v1577, 0.0625
    %v1655 = vmul.f32 %v1651, 0.0625
    %v1656 = vmul.f32 %v1654, %v1654
    %v1657 = vsub.f32 %v1655, %v1656
    %v1658 = vmax.f32 %v1657, 0.0
    %v1659 = vadd.f32 %v1658, 0.001
    %v1660 = vrsqrt.pop %v1659
    %v1661 = vmul.f32 %v1658, %v1660
    %v1662 = vmul.f32 %v1661, %v1660
    %vm1663 = vcmask 11264
    %v1664 = vsel %vm1663, %v1662, 0.0
    %1665 = vadd.xlane.f32.xlu0 %v1664
    %v1666 = vpop.xlane.xlu0 %1665
    %v1667 = vmul.f32 %v1666, 0.5
    %v1668 = vadd.f32 %v1667, 1e-05
    %v1669 = vrsqrt.pop %v1668
    %1671 = vset.pattern.permute.xlu0 4
    %1672 = vperm.xlu0 %1671, %v1432
    %v1673 = vpop.permute.xlu0 %1672
    %v1675 = vmul.f32 %v1673, %v1660
    %v1676 = vmul.f32 %v1675, %v1669
    %v1677 = vmul.f32 %v1654, %v1676
    %1678 = vset.pattern.permute.xlu0 5
    %1679 = vperm.xlu0 %1678, %v1432
    %v1680 = vpop.permute.xlu0 %1679
    %v1682 = vsub.f32 %v1680, %v1677
    %v1684 = vsel %vm518, %v1676, 0
    %1686 = vmatprep.subr.mxu0 0.0
    %1687 = vmatpush1.msra.mxu0 0.0
    %1688 = vmatprep.subr.mxu0 0.0
    %1689 = vmatpush1.msra.mxu0 0.0
    %1690 = vmatprep.subr.mxu0 0.0
    %1691 = vmatpush1.msra.mxu0 0.0
    %1692 = vmatprep.subr.mxu0 0.0
    %1693 = vmatpush1.msra.mxu0 0.0
    %1694 = vmatprep.subr.mxu0 0.0
    %1695 = vmatpush1.msra.mxu0 0.0
    %1696 = vmatprep.subr.mxu0 0.0
    %1697 = vmatpush1.msra.mxu0 0.0
    %1698 = vmatprep.subr.mxu0 0.0
    %1699 = vmatpush1.msra.mxu0 0.0
    %1700 = vmatprep.subr.mxu0 0.0
    %1701 = vmatpush1.msra.mxu0 0.0
    %1702 = vmatprep.subr.mxu0 0.0
    %1703 = vmatpush1.msra.mxu0 0.0
    %1704 = vmatprep.subr.mxu0 0.0
    %1705 = vmatpush1.msra.mxu0 0.0
    %1706 = vmatprep.subr.mxu0 0.0
    %1707 = vmatpush1.msra.mxu0 0.0
    %1708 = vmatprep.subr.mxu0 0.0
    %1709 = vmatpush1.msra.mxu0 0.0
    %1710 = vmatprep.subr.mxu0 0.0
    %1711 = vmatpush1.msra.mxu0 0.0
    %1712 = vmatprep.subr.mxu0 0.0
    %1713 = vmatpush1.msra.mxu0 0.0
    %1714 = vmatprep.subr.mxu0 0.0
    %1715 = vmatpush1.msra.mxu0 0.0
    %1716 = vmatprep.subr.mxu0 0.0
    %1717 = vmatpush1.msra.mxu0 %v697
    %1718 = vmatprep.subr.mxu0 0.0
    %1719 = vmatpush2.msra.mxu0 0.0
    %1720 = vmatprep.subr.mxu0 0.0
    %1721 = vmatpush2.msra.mxu0 0.0
    %1722 = vmatprep.subr.mxu0 0.0
    %1723 = vmatpush2.msra.mxu0 0.0
    %1724 = vmatprep.subr.mxu0 0.0
    %1725 = vmatpush2.msra.mxu0 0.0
    %1726 = vmatprep.subr.mxu0 0.0
    %1727 = vmatpush2.msra.mxu0 0.0
    %1728 = vmatprep.subr.mxu0 0.0
    %1729 = vmatpush2.msra.mxu0 0.0
    %1730 = vmatprep.subr.mxu0 0.0
    %1731 = vmatpush2.msra.mxu0 0.0
    %1732 = vmatprep.subr.mxu0 0.0
    %1733 = vmatpush2.msra.mxu0 0.0
    %1734 = vmatprep.subr.mxu0 0.0
    %1735 = vmatpush2.msra.mxu0 0.0
    %1736 = vmatprep.subr.mxu0 0.0
    %1737 = vmatpush2.msra.mxu0 0.0
    %1738 = vmatprep.subr.mxu0 0.0
    %1739 = vmatpush2.msra.mxu0 0.0
    %1740 = vmatprep.subr.mxu0 0.0
    %1741 = vmatpush2.msra.mxu0 0.0
    %1742 = vmatprep.subr.mxu0 0.0
    %1743 = vmatpush2.msra.mxu0 0.0
    %1744 = vmatprep.subr.mxu0 0.0
    %1745 = vmatpush2.msra.mxu0 0.0
    %1746 = vmatprep.subr.mxu0 0.0
    %1747 = vmatpush2.msra.mxu0 0.0
    %1748 = vmatprep.subr.mxu0 0.0
    %1749 = vmatpush2.msra.mxu0 0.0
    %1750 = vmatprep.mubr.f32.mxu0 0.0
    %1751 = vmatmul.mubr.f32.gmra.mxu0 %v1684
    %v1752 = vpop.f32.mrf.mxu0
    %v1753 = vadd.f32 0.0, %v1752
    %v1754 = vpop.f32.mrf.mxu0
    %1755 = vdwg.mxu0
    %v1757 = vsel %vm518, %v1682, 0
    %1759 = vmatprep.subr.mxu0 0.0
    %1760 = vmatpush1.msra.mxu0 0.0
    %1761 = vmatprep.subr.mxu0 0.0
    %1762 = vmatpush1.msra.mxu0 0.0
    %1763 = vmatprep.subr.mxu0 0.0
    %1764 = vmatpush1.msra.mxu0 0.0
    %1765 = vmatprep.subr.mxu0 0.0
    %1766 = vmatpush1.msra.mxu0 0.0
    %1767 = vmatprep.subr.mxu0 0.0
    %1768 = vmatpush1.msra.mxu0 0.0
    %1769 = vmatprep.subr.mxu0 0.0
    %1770 = vmatpush1.msra.mxu0 0.0
    %1771 = vmatprep.subr.mxu0 0.0
    %1772 = vmatpush1.msra.mxu0 0.0
    %1773 = vmatprep.subr.mxu0 0.0
    %1774 = vmatpush1.msra.mxu0 0.0
    %1775 = vmatprep.subr.mxu0 0.0
    %1776 = vmatpush1.msra.mxu0 0.0
    %1777 = vmatprep.subr.mxu0 0.0
    %1778 = vmatpush1.msra.mxu0 0.0
    %1779 = vmatprep.subr.mxu0 0.0
    %1780 = vmatpush1.msra.mxu0 0.0
    %1781 = vmatprep.subr.mxu0 0.0
    %1782 = vmatpush1.msra.mxu0 0.0
    %1783 = vmatprep.subr.mxu0 0.0
    %1784 = vmatpush1.msra.mxu0 0.0
    %1785 = vmatprep.subr.mxu0 0.0
    %1786 = vmatpush1.msra.mxu0 0.0
    %1787 = vmatprep.subr.mxu0 0.0
    %1788 = vmatpush1.msra.mxu0 0.0
    %1789 = vmatprep.subr.mxu0 0.0
    %1790 = vmatpush1.msra.mxu0 %v697
    %1791 = vmatprep.subr.mxu0 0.0
    %1792 = vmatpush2.msra.mxu0 0.0
    %1793 = vmatprep.subr.mxu0 0.0
    %1794 = vmatpush2.msra.mxu0 0.0
    %1795 = vmatprep.subr.mxu0 0.0
    %1796 = vmatpush2.msra.mxu0 0.0
    %1797 = vmatprep.subr.mxu0 0.0
    %1798 = vmatpush2.msra.mxu0 0.0
    %1799 = vmatprep.subr.mxu0 0.0
    %1800 = vmatpush2.msra.mxu0 0.0
    %1801 = vmatprep.subr.mxu0 0.0
    %1802 = vmatpush2.msra.mxu0 0.0
    %1803 = vmatprep.subr.mxu0 0.0
    %1804 = vmatpush2.msra.mxu0 0.0
    %1805 = vmatprep.subr.mxu0 0.0
    %1806 = vmatpush2.msra.mxu0 0.0
    %1807 = vmatprep.subr.mxu0 0.0
    %1808 = vmatpush2.msra.mxu0 0.0
    %1809 = vmatprep.subr.mxu0 0.0
    %1810 = vmatpush2.msra.mxu0 0.0
    %1811 = vmatprep.subr.mxu0 0.0
    %1812 = vmatpush2.msra.mxu0 0.0
    %1813 = vmatprep.subr.mxu0 0.0
    %1814 = vmatpush2.msra.mxu0 0.0
    %1815 = vmatprep.subr.mxu0 0.0
    %1816 = vmatpush2.msra.mxu0 0.0
    %1817 = vmatprep.subr.mxu0 0.0
    %1818 = vmatpush2.msra.mxu0 0.0
    %1819 = vmatprep.subr.mxu0 0.0
    %1820 = vmatpush2.msra.mxu0 0.0
    %1821 = vmatprep.subr.mxu0 0.0
    %1822 = vmatpush2.msra.mxu0 0.0
    %1823 = vmatprep.mubr.f32.mxu0 0.0
    %1824 = vmatmul.mubr.f32.gmra.mxu0 %v1757
    %v1825 = vpop.f32.mrf.mxu0
    %v1826 = vadd.f32 0.0, %v1825
    %v1827 = vpop.f32.mrf.mxu0
    %1828 = vdwg.mxu0
    %v1829 = vmul.f32 %v1504, %v1753
    %v1830 = vadd.f32 %v1829, %v1826
    %v1831 = vmax.f32 %v1830, 0.0
    %v1832 = vld [vmem:[%s6] sm:$0x1]
    %1833 = vset.pattern.permute.xlu0 6
    %1834 = vperm.xlu0 %1833, %v1432
    %v1835 = vpop.permute.xlu0 %1834
    %v1837 = vmul.f32 %v1831, %v1835
    %vm1838 = vcmask 257024
    %v1839 = vsel %vm1838, %v1837, 0.0
    %v1840 = vrot.slane %v1839, 4
    %v1841 = vadd.f32 %v1839, %v1840
    %v1842 = vrot.slane %v1841, 2
    %v1843 = vadd.f32 %v1841, %v1842
    %v1844 = vrot.slane %v1843, 1
    %v1845 = vadd.f32 %v1843, %v1844
    %1847 = vset.pattern.permute.xlu0 7
    %1848 = vperm.xlu0 %1847, %v1832
    %v1849 = vpop.permute.xlu0 %1848
    %v1851 = vadd.f32 %v1845, %v1849
    %vm1852 = vcmask 253952
    %1853 = vst.msk [vmem:[#allocation2] sm:$0x1] %vm1852, %v1851
    // Predicated region
    $region30: #{tpu_custom_call.1} parent=1 // pred_check
      _
    $region31: #{tpu_custom_call.1} parent=1 // pred_check_branch
      %1855 = sbr.rel (0) target = $region33
    $region32: #{tpu_custom_call.1} parent=1 // pred_region
      %s1857 = ssub.s32 16, 16
      %1858 = vsyncadd [#allocation3], %s1857
      %s1860 = sshll.u32 [#allocation2], 4
      %s1861 = int_to_ptr.vmem [resolvable:$true] %s1860
      %1863 = dma.vmem_to_hbm [thread:$0]  %s1861, 16, %s7, [#allocation3]
    $region33: #{tpu_custom_call.1} parent=1 // pred_fallthru
      _
    // Predicated region
    $region34: #{tpu_custom_call.1} parent=1 // pred_check
      _
    $region35: #{tpu_custom_call.1} parent=1 // pred_check_branch
      %1865 = sbr.rel (0) target = $region37
    $region36: #{tpu_custom_call.1} parent=1 // pred_region
      %1866 = dma.done [#allocation3], 16
    $region37: #{tpu_custom_call.1} parent=1 // pred_fallthru
      _
    %1867 = vsyncpa [#allocation3], 1

</llo_original>
